<compile_context>
chip_gen: v7x
topology: tpu7x:2x2x1
jax: 0.10.0
libtpu: 0.0.40
codegen_flags: <defaults>
</compile_context>

<pallas_src>
import functools

import jax
import jax.numpy as jnp
from jax.experimental import pallas as pl
from jax.experimental.pallas import tpu as pltpu

C1 = 256   # first conv out-channels  (fixed by the module)
C2 = 128   # second conv out-channels (fixed by the module)
H_FC = 64  # fc hidden                (fixed by the module)


def binary_cnn_kernel(cols1_ref, w1_ref, b1_ref, w2_ref, b2_ref,
                      wf1_ref, bf1_ref, wf2_ref, bf2_ref,
                      out_ref, *, L4, L3c, L3p):
    """One TB-sized batch tile per grid step, fully vectorized over TB.

    cols1_ref: (TB, 3, L2p, 3*C_in) bf16  group-major conv1 im2col (from wrapper)
    w1_ref   : (3*C_in, 256) bf16, b1_ref: (1, 256) f32
    w2_ref   : (3*256, 128)  bf16, b2_ref: (1, 128) f32
    wf1_ref  : (128, 64) bf16,     bf1_ref: (1, 64) f32
    wf2_ref  : (64, 1)  bf16,      bf2_ref: (1, 1) f32
    out_ref  : (TB, 1) f32 -- disjoint block per grid step
    """
    TB, _, L2p, K1 = cols1_ref.shape

    # --- Conv1d(C_in, 256, 3): ONE im2col matmul, M = TB*3*L2p, K = 3*C_in ----
    cols1 = cols1_ref[...]                                     # (TB, 3, L2p, K1) bf16
    h1 = jnp.dot(cols1.reshape(TB * 3 * L2p, K1), w1_ref[...],
                 preferred_element_type=jnp.float32)
    h1 = jnp.maximum(h1 + b1_ref[...], 0.0)                    # Dropout = identity (eval)
    h1 = h1.reshape(TB, 3, L2p, C1)                            # [b, r, g] = conv pos 3g+r

    # --- MaxPool1d(3): group-major rows -> elementwise max of 3 aligned slabs -
    p1 = jnp.maximum(jnp.maximum(h1[:, 0], h1[:, 1]), h1[:, 2])    # (TB, L2p, 256) f32

    # --- Conv1d(256, 128, 3): im2col from p1 (only the 3*L4 pooled positions) -
    cols2 = jnp.concatenate([p1[:, k:k + L3c, :] for k in range(3)], axis=-1)
    if L3p != L3c:                                              # pad rows to sublane mult
        cols2 = jnp.concatenate(
            [cols2, jnp.zeros((TB, L3p - L3c, 3 * C1), cols2.dtype)], axis=1)
    cols2 = cols2.astype(w2_ref.dtype)                          # single f32 -> bf16 cast
    h2 = jnp.dot(cols2.reshape(TB * L3p, 3 * C1), w2_ref[...],
                 preferred_element_type=jnp.float32)
    h2 = jnp.maximum(h2 + b2_ref[...], 0.0).reshape(TB, L3p, C2)   # f32

    # --- MaxPool1d(3) + AdaptiveAvgPool1d(1): rolling max via unit-stride shifts,
    #     then masked mean over the window starts (t % 3 == 0, t < 3*L4). -------
    s1 = jnp.concatenate([h2[:, 1:, :], jnp.zeros((TB, 1, C2), jnp.float32)], axis=1)
    s2 = jnp.concatenate([h2[:, 2:, :], jnp.zeros((TB, 2, C2), jnp.float32)], axis=1)
    m = jnp.maximum(jnp.maximum(h2, s1), s2)                    # m[:, t] = max(h2[t..t+2])
    t = jax.lax.broadcasted_iota(jnp.int32, (1, L3p, 1), 1)
    sel = jnp.logical_and(t % 3 == 0, t < 3 * L4).astype(jnp.float32)
    pooled = jnp.sum(m * sel, axis=1) * (1.0 / L4)              # (TB, 128) f32

    # --- Linear(128,64) + ReLU + Linear(64,1) + Sigmoid, batched at M = TB -----
    g = jnp.maximum(
        jnp.dot(pooled.astype(wf1_ref.dtype), wf1_ref[...],
                preferred_element_type=jnp.float32) + bf1_ref[...], 0.0)
    zz = jnp.dot(g.astype(wf2_ref.dtype), wf2_ref[...],
                 preferred_element_type=jnp.float32) + bf2_ref[...]
    out_ref[...] = jax.nn.sigmoid(zz)


def binary_cnn_forward(x, params, *, block_b=8):
    """x: (B, L, C_in) float32 -> ((B, 1) float32,)  -- mirrors module.forward."""
    w1, b1, w2, b2, wf1, bf1, wf2, bf2 = params
    B, L, C_in = x.shape
    L1 = L - 2            # after Conv1d(k=3)
    L2 = L1 // 3          # after MaxPool1d(3)
    L3 = L2 - 2           # after Conv1d(k=3)
    L4 = L3 // 3          # after MaxPool1d(3)
    assert L2 >= 3 and L4 >= 1, "sequence too short for this net"

    TB = block_b
    G = pl.cdiv(B, TB)
    B_pad = G * TB
    if B_pad != B:
        x = jnp.pad(x, ((0, B_pad - B), (0, 0), (0, 0)))

    # conv1 im2col hoisted to the wrapper, GROUP-MAJOR: row (r, g) == window at
    # position 3*g + r.  Only the positions consumed by MaxPool1d(3) are kept,
    # and L2 is padded to a sublane multiple so in-kernel reshapes are free.
    cols = jnp.concatenate([x[:, k:k + 3 * L2, :] for k in range(3)], axis=-1)
    cols = cols.reshape(B_pad, L2, 3, 3 * C_in).transpose(0, 2, 1, 3)
    L2p = ((L2 + 7) // 8) * 8
    if L2p != L2:
        cols = jnp.pad(cols, ((0, 0), (0, 0), (0, L2p - L2), (0, 0)))
    cols = cols.astype(jnp.bfloat16)                  # (B_pad, 3, L2p, 3*C_in)

    L3c = 3 * L4                                      # conv2 positions actually consumed
    L3p = ((L3c + 7) // 8) * 8

    # bf16 matmul operands (f32 accumulation in-kernel); f32 biases.
    w1m = w1.reshape(3 * C_in, C1).astype(jnp.bfloat16)      # (3*C_in, 256)
    w2m = w2.reshape(3 * C1, C2).astype(jnp.bfloat16)        # (768, 128)
    wf1b = wf1.astype(jnp.bfloat16)
    wf2b = wf2.astype(jnp.bfloat16)
    b1f = jnp.reshape(b1, (1, -1)).astype(jnp.float32)
    b2f = jnp.reshape(b2, (1, -1)).astype(jnp.float32)
    bf1f = jnp.reshape(bf1, (1, -1)).astype(jnp.float32)
    bf2f = jnp.reshape(bf2, (1, -1)).astype(jnp.float32)

    def const_spec(shape):
        n = len(shape)
        return pl.BlockSpec(shape, lambda g, _n=n: (0,) * _n)

    kernel = functools.partial(binary_cnn_kernel, L4=L4, L3c=L3c, L3p=L3p)

    out = pl.pallas_call(
        kernel,
        out_shape=jax.ShapeDtypeStruct((B_pad, 1), jnp.float32),
        grid_spec=pltpu.PrefetchScalarGridSpec(
            num_scalar_prefetch=0,
            grid=(G,),
            in_specs=[
                pl.BlockSpec((TB, 3, L2p, 3 * C_in), lambda g: (g, 0, 0, 0)),
                const_spec(w1m.shape), const_spec(b1f.shape),
                const_spec(w2m.shape), const_spec(b2f.shape),
                const_spec(wf1b.shape), const_spec(bf1f.shape),
                const_spec(wf2b.shape), const_spec(bf2f.shape),
            ],
            # disjoint output block per grid step -> safe to run "parallel"
            out_specs=pl.BlockSpec((TB, 1), lambda g: (g, 0)),
        ),
        compiler_params=pltpu.CompilerParams(
            dimension_semantics=("parallel",),
            vmem_limit_bytes=48 * 1024 * 1024),
    )(cols, w1m, b1f, w2m, b2f, wf1b, bf1f, wf2b, bf2f)
    return (out[:B],)


def reference_forward(x, params):
    """Pure-JAX reference mirroring the kernel's bf16-operand / f32-accumulate math."""
    w1, b1, w2, b2, wf1, bf1, wf2, bf2 = params
    bf16 = jnp.bfloat16

    def conv1d(h, w, b):                        # h: (B, L, Cin) f32, w: (K, Cin, Cout)
        K, Cin, Cout = w.shape
        Lo = h.shape[1] - K + 1
        cols = jnp.concatenate([h[:, k:k + Lo, :] for k in range(K)],
                               axis=-1).astype(bf16)
        wm = w.reshape(K * Cin, Cout).astype(bf16)
        out = jnp.einsum('blk,kc->blc', cols, wm,
                         preferred_element_type=jnp.float32)
        return out + jnp.reshape(b, (1, 1, -1)).astype(jnp.float32)

    def maxpool3(h):                            # MaxPool1d(3) over length
        Lp = h.shape[1] // 3
        return h[:, :Lp * 3, :].reshape(h.shape[0], Lp, 3, h.shape[2]).max(axis=2)

    h = jax.nn.relu(conv1d(x, w1, b1))
    h = maxpool3(h)
    h = jax.nn.relu(conv1d(h, w2, b2))
    h = maxpool3(h)
    h = h.mean(axis=1)                          # AdaptiveAvgPool1d(1) + flatten
    g = jax.nn.relu(jnp.dot(h.astype(bf16), wf1.astype(bf16),
                            preferred_element_type=jnp.float32)
                    + jnp.reshape(bf1, (1, -1)))
    z = jnp.dot(g.astype(bf16), wf2.astype(bf16),
                preferred_element_type=jnp.float32) + jnp.reshape(bf2, (1, -1))
    return jax.nn.sigmoid(z)


def init_params(key, input_size):
    ks = jax.random.split(key, 6)
    # Conv weights stored as (K, Cin, Cout) == permuted PyTorch (Cout, Cin, K).
    w1 = jax.random.normal(ks[0], (3, input_size, C1), jnp.float32) * 0.1
    b1 = jax.random.normal(ks[1], (1, C1), jnp.float32) * 0.01
    w2 = jax.random.normal(ks[2], (3, C1, C2), jnp.float32) * 0.05
    b2 = jax.random.normal(ks[3], (1, C2), jnp.float32) * 0.01
    # FC: xavier-normal-ish weights, zero bias (as in the module's __init__).
    wf1 = jax.random.normal(ks[4], (C2, H_FC), jnp.float32) * (2.0 / (C2 + H_FC)) ** 0.5
    bf1 = jnp.zeros((1, H_FC), jnp.float32)
    wf2 = jax.random.normal(ks[5], (H_FC, 1), jnp.float32) * (2.0 / (H_FC + 1)) ** 0.5
    bf2 = jnp.zeros((1, 1), jnp.float32)
    return (w1, b1, w2, b2, wf1, bf1, wf2, bf2)


if __name__ == "__main__":
    # small: L=32 -> 30 -> 10 -> 8 -> 2 -> 1 ; B=12 exercises batch padding (TB=8),
    # L2=10 -> L2p=16 and L3c=6 -> L3p=8 exercise the sublane-padding paths.
    B, L, INPUT_SIZE = 12, 32, 8
    key = jax.random.PRNGKey(0)
    kx, kp = jax.random.split(key)
    x = jax.random.normal(kx, (B, L, INPUT_SIZE), jnp.float32)
    params = init_params(kp, INPUT_SIZE)

    fwd = jax.jit(functools.partial(binary_cnn_forward, block_b=8))
    (y,) = fwd(x, params)
    y = jax.block_until_ready(y)

    y_ref = reference_forward(x, params)
    assert y.shape == (B, 1)
    assert jnp.allclose(y, y_ref, atol=1e-3, rtol=1e-3), (y, y_ref)
    print("KERNEL_OK")
</pallas_src>

<mosaic_0001>
module attributes {stable_mosaic.version = 11 : i64} {
  func.func @binary_cnn_kernel(%arg0: i32, %arg1: memref<8x3x16x24xbf16, #tpu.memory_space<vmem>>, %arg2: memref<24x256xbf16, #tpu.memory_space<vmem>>, %arg3: memref<1x256xf32, #tpu.memory_space<vmem>>, %arg4: memref<768x128xbf16, #tpu.memory_space<vmem>>, %arg5: memref<1x128xf32, #tpu.memory_space<vmem>>, %arg6: memref<128x64xbf16, #tpu.memory_space<vmem>>, %arg7: memref<1x64xf32, #tpu.memory_space<vmem>>, %arg8: memref<64x1xbf16, #tpu.memory_space<vmem>>, %arg9: memref<1x1xf32, #tpu.memory_space<vmem>>, %arg10: memref<8x1xf32, #tpu.memory_space<vmem>>) attributes {dimension_semantics = [#tpu.dimension_semantics<parallel>], iteration_bounds = array<i64: 2>, scalar_prefetch = 0 : i64, scratch_operands = 0 : i64, tpu.core_type = #tpu.core_type<tc>, window_params = [{transform_indices = @transform_0, window_bounds = array<i64: 8, 3, 16, 24>}, {pipeline_mode = #tpu.pipeline_mode<synchronous>, transform_indices = @transform_1, window_bounds = array<i64: 24, 256>}, {pipeline_mode = #tpu.pipeline_mode<synchronous>, transform_indices = @transform_2, window_bounds = array<i64: 1, 256>}, {pipeline_mode = #tpu.pipeline_mode<synchronous>, transform_indices = @transform_3, window_bounds = array<i64: 768, 128>}, {pipeline_mode = #tpu.pipeline_mode<synchronous>, transform_indices = @transform_4, window_bounds = array<i64: 1, 128>}, {pipeline_mode = #tpu.pipeline_mode<synchronous>, transform_indices = @transform_5, window_bounds = array<i64: 128, 64>}, {pipeline_mode = #tpu.pipeline_mode<synchronous>, transform_indices = @transform_6, window_bounds = array<i64: 1, 64>}, {pipeline_mode = #tpu.pipeline_mode<synchronous>, transform_indices = @transform_7, window_bounds = array<i64: 64, 1>}, {pipeline_mode = #tpu.pipeline_mode<synchronous>, transform_indices = @transform_8, window_bounds = array<i64: 1, 1>}, {transform_indices = @transform_9, window_bounds = array<i64: 8, 1>}]} {
    %c0 = arith.constant 0 : index
    %c0_0 = arith.constant 0 : index
    %c0_1 = arith.constant 0 : index
    %c0_2 = arith.constant 0 : index
    %0 = vector.load %arg1[%c0, %c0_0, %c0_1, %c0_2] : memref<8x3x16x24xbf16, #tpu.memory_space<vmem>>, vector<8x3x16x24xbf16>
    %1 = vector.shape_cast %0 : vector<8x3x16x24xbf16> to vector<384x24xbf16>
    %c0_3 = arith.constant 0 : index
    %c0_4 = arith.constant 0 : index
    %2 = vector.load %arg2[%c0_3, %c0_4] : memref<24x256xbf16, #tpu.memory_space<vmem>>, vector<24x256xbf16>
    %cst = arith.constant dense<0.000000e+00> : vector<384x256xf32>
    %3 = tpu.matmul %1, %2, %cst {dimension_numbers = #tpu.dot_dimension_numbers<[1], [0], [0], [1], [0, 0, 1, 1], [], []>} : vector<384x24xbf16>, vector<24x256xbf16>, vector<384x256xf32> -> vector<384x256xf32>
    %c0_5 = arith.constant 0 : index
    %c0_6 = arith.constant 0 : index
    %4 = vector.load %arg3[%c0_5, %c0_6] : memref<1x256xf32, #tpu.memory_space<vmem>>, vector<1x256xf32>
    %5 = vector.broadcast %4 : vector<1x256xf32> to vector<384x256xf32>
    %6 = arith.addf %3, %5 : vector<384x256xf32>
    %cst_7 = arith.constant 0.000000e+00 : f32
    %7 = vector.broadcast %cst_7 : f32 to vector<384x256xf32>
    %8 = arith.maximumf %6, %7 : vector<384x256xf32>
    %9 = vector.shape_cast %8 : vector<384x256xf32> to vector<8x3x16x256xf32>
    %10 = vector.extract_strided_slice %9 {offsets = [0, 0, 0, 0], sizes = [8, 1, 16, 256], strides = [1, 1, 1, 1]} : vector<8x3x16x256xf32> to vector<8x1x16x256xf32>
    %11 = vector.shape_cast %10 : vector<8x1x16x256xf32> to vector<8x16x256xf32>
    %12 = vector.extract_strided_slice %9 {offsets = [0, 1, 0, 0], sizes = [8, 1, 16, 256], strides = [1, 1, 1, 1]} : vector<8x3x16x256xf32> to vector<8x1x16x256xf32>
    %13 = vector.shape_cast %12 : vector<8x1x16x256xf32> to vector<8x16x256xf32>
    %14 = arith.maximumf %11, %13 : vector<8x16x256xf32>
    %15 = vector.extract_strided_slice %9 {offsets = [0, 2, 0, 0], sizes = [8, 1, 16, 256], strides = [1, 1, 1, 1]} : vector<8x3x16x256xf32> to vector<8x1x16x256xf32>
    %16 = vector.shape_cast %15 : vector<8x1x16x256xf32> to vector<8x16x256xf32>
    %17 = arith.maximumf %14, %16 : vector<8x16x256xf32>
    %18 = vector.extract_strided_slice %17 {offsets = [0, 0, 0], sizes = [8, 6, 256], strides = [1, 1, 1]} : vector<8x16x256xf32> to vector<8x6x256xf32>
    %19 = vector.extract_strided_slice %17 {offsets = [0, 1, 0], sizes = [8, 6, 256], strides = [1, 1, 1]} : vector<8x16x256xf32> to vector<8x6x256xf32>
    %20 = vector.extract_strided_slice %17 {offsets = [0, 2, 0], sizes = [8, 6, 256], strides = [1, 1, 1]} : vector<8x16x256xf32> to vector<8x6x256xf32>
    %21 = tpu.concatenate %18, %19, %20 in 2 : vector<8x6x256xf32>, vector<8x6x256xf32>, vector<8x6x256xf32> -> vector<8x6x768xf32>
    %cst_8 = arith.constant 0.000000e+00 : f32
    %22 = vector.broadcast %cst_8 : f32 to vector<8x2x768xf32>
    %23 = tpu.concatenate %21, %22 in 1 : vector<8x6x768xf32>, vector<8x2x768xf32> -> vector<8x8x768xf32>
    %24 = arith.truncf %23 : vector<8x8x768xf32> to vector<8x8x768xbf16>
    %25 = vector.shape_cast %24 : vector<8x8x768xbf16> to vector<64x768xbf16>
    %c0_9 = arith.constant 0 : index
    %c0_10 = arith.constant 0 : index
    %26 = vector.load %arg4[%c0_9, %c0_10] : memref<768x128xbf16, #tpu.memory_space<vmem>>, vector<768x128xbf16>
    %cst_11 = arith.constant dense<0.000000e+00> : vector<64x128xf32>
    %27 = tpu.matmul %25, %26, %cst_11 {dimension_numbers = #tpu.dot_dimension_numbers<[1], [0], [0], [1], [0, 0, 1, 1], [], []>} : vector<64x768xbf16>, vector<768x128xbf16>, vector<64x128xf32> -> vector<64x128xf32>
    %c0_12 = arith.constant 0 : index
    %c0_13 = arith.constant 0 : index
    %28 = vector.load %arg5[%c0_12, %c0_13] : memref<1x128xf32, #tpu.memory_space<vmem>>, vector<1x128xf32>
    %29 = vector.broadcast %28 : vector<1x128xf32> to vector<64x128xf32>
    %30 = arith.addf %27, %29 : vector<64x128xf32>
    %cst_14 = arith.constant 0.000000e+00 : f32
    %31 = vector.broadcast %cst_14 : f32 to vector<64x128xf32>
    %32 = arith.maximumf %30, %31 : vector<64x128xf32>
    %33 = vector.shape_cast %32 : vector<64x128xf32> to vector<8x8x128xf32>
    %34 = vector.extract_strided_slice %33 {offsets = [0, 1, 0], sizes = [8, 7, 128], strides = [1, 1, 1]} : vector<8x8x128xf32> to vector<8x7x128xf32>
    %cst_15 = arith.constant 0.000000e+00 : f32
    %35 = vector.broadcast %cst_15 : f32 to vector<8x1x128xf32>
    %36 = tpu.concatenate %34, %35 in 1 : vector<8x7x128xf32>, vector<8x1x128xf32> -> vector<8x8x128xf32>
    %37 = vector.extract_strided_slice %33 {offsets = [0, 2, 0], sizes = [8, 6, 128], strides = [1, 1, 1]} : vector<8x8x128xf32> to vector<8x6x128xf32>
    %cst_16 = arith.constant 0.000000e+00 : f32
    %38 = vector.broadcast %cst_16 : f32 to vector<8x2x128xf32>
    %39 = tpu.concatenate %37, %38 in 1 : vector<8x6x128xf32>, vector<8x2x128xf32> -> vector<8x8x128xf32>
    %40 = arith.maximumf %33, %36 : vector<8x8x128xf32>
    %41 = arith.maximumf %40, %39 : vector<8x8x128xf32>
    %42 = tpu.iota {dimensions = array<i32: 1>} : vector<1x8x1xi32>
    %c3_i32 = arith.constant 3 : i32
    %c0_i32 = arith.constant 0 : i32
    %43 = arith.cmpi eq, %c3_i32, %c0_i32 : i32
    %c1_i32 = arith.constant 1 : i32
    %44 = arith.select %43, %c1_i32, %c3_i32 : i32
    %45 = vector.broadcast %44 : i32 to vector<1x8x1xi32>
    %46 = arith.remsi %42, %45 : vector<1x8x1xi32>
    %c0_i32_17 = arith.constant 0 : i32
    %47 = vector.broadcast %c0_i32_17 : i32 to vector<1x8x1xi32>
    %48 = arith.cmpi ne, %46, %47 : vector<1x8x1xi32>
    %c0_i32_18 = arith.constant 0 : i32
    %49 = vector.broadcast %c0_i32_18 : i32 to vector<1x8x1xi32>
    %50 = arith.cmpi slt, %46, %49 : vector<1x8x1xi32>
    %c0_i32_19 = arith.constant 0 : i32
    %51 = arith.cmpi slt, %44, %c0_i32_19 : i32
    %52 = vector.broadcast %51 : i1 to vector<1x8x1xi1>
    %53 = vector.broadcast %52 : vector<1x8x1xi1> to vector<1x8x1xi1>
    %54 = arith.xori %50, %53 : vector<1x8x1xi1>
    %55 = arith.andi %54, %48 : vector<1x8x1xi1>
    %56 = vector.broadcast %44 : i32 to vector<1x8x1xi32>
    %57 = arith.addi %46, %56 : vector<1x8x1xi32>
    %58 = arith.select %55, %57, %46 : vector<1x8x1xi1>, vector<1x8x1xi32>
    %c0_i32_20 = arith.constant 0 : i32
    %59 = vector.broadcast %c0_i32_20 : i32 to vector<1x8x1xi32>
    %60 = arith.cmpi eq, %58, %59 : vector<1x8x1xi32>
    %c6_i32 = arith.constant 6 : i32
    %61 = vector.broadcast %c6_i32 : i32 to vector<1x8x1xi32>
    %62 = arith.cmpi slt, %42, %61 : vector<1x8x1xi32>
    %63 = arith.andi %60, %62 : vector<1x8x1xi1>
    %64 = arith.extui %63 : vector<1x8x1xi1> to vector<1x8x1xi32>
    %65 = arith.sitofp %64 : vector<1x8x1xi32> to vector<1x8x1xf32>
    %66 = vector.broadcast %65 : vector<1x8x1xf32> to vector<8x8x128xf32>
    %67 = arith.mulf %41, %66 : vector<8x8x128xf32>
    %cst_21 = arith.constant dense<0.000000e+00> : vector<8x128xf32>
    %68 = vector.multi_reduction <add>, %67, %cst_21 [1] : vector<8x8x128xf32> to vector<8x128xf32>
    %cst_22 = arith.constant 5.000000e-01 : f32
    %69 = vector.broadcast %cst_22 : f32 to vector<8x128xf32>
    %70 = arith.mulf %68, %69 : vector<8x128xf32>
    %71 = arith.truncf %70 : vector<8x128xf32> to vector<8x128xbf16>
    %c0_23 = arith.constant 0 : index
    %c0_24 = arith.constant 0 : index
    %72 = vector.load %arg6[%c0_23, %c0_24] : memref<128x64xbf16, #tpu.memory_space<vmem>>, vector<128x64xbf16>
    %cst_25 = arith.constant dense<0.000000e+00> : vector<8x64xf32>
    %73 = tpu.matmul %71, %72, %cst_25 {dimension_numbers = #tpu.dot_dimension_numbers<[1], [0], [0], [1], [0, 0, 1, 1], [], []>} : vector<8x128xbf16>, vector<128x64xbf16>, vector<8x64xf32> -> vector<8x64xf32>
    %c0_26 = arith.constant 0 : index
    %c0_27 = arith.constant 0 : index
    %74 = vector.load %arg7[%c0_26, %c0_27] : memref<1x64xf32, #tpu.memory_space<vmem>>, vector<1x64xf32>
    %75 = vector.broadcast %74 : vector<1x64xf32> to vector<8x64xf32>
    %76 = arith.addf %73, %75 : vector<8x64xf32>
    %cst_28 = arith.constant 0.000000e+00 : f32
    %77 = vector.broadcast %cst_28 : f32 to vector<8x64xf32>
    %78 = arith.maximumf %76, %77 : vector<8x64xf32>
    %79 = arith.truncf %78 : vector<8x64xf32> to vector<8x64xbf16>
    %c0_29 = arith.constant 0 : index
    %c0_30 = arith.constant 0 : index
    %80 = vector.load %arg8[%c0_29, %c0_30] : memref<64x1xbf16, #tpu.memory_space<vmem>>, vector<64x1xbf16>
    %cst_31 = arith.constant dense<0.000000e+00> : vector<8x1xf32>
    %81 = tpu.matmul %79, %80, %cst_31 {dimension_numbers = #tpu.dot_dimension_numbers<[1], [0], [0], [1], [0, 0, 1, 1], [], []>} : vector<8x64xbf16>, vector<64x1xbf16>, vector<8x1xf32> -> vector<8x1xf32>
    %c0_32 = arith.constant 0 : index
    %c0_33 = arith.constant 0 : index
    %82 = vector.load %arg9[%c0_32, %c0_33] : memref<1x1xf32, #tpu.memory_space<vmem>>, vector<1x1xf32>
    %83 = vector.broadcast %82 : vector<1x1xf32> to vector<8x1xf32>
    %84 = arith.addf %81, %83 : vector<8x1xf32>
    %85 = arith.negf %84 : vector<8x1xf32>
    %86 = math.exp %85 : vector<8x1xf32>
    %cst_34 = arith.constant 1.000000e+00 : f32
    %87 = vector.broadcast %cst_34 : f32 to vector<8x1xf32>
    %88 = arith.addf %87, %86 : vector<8x1xf32>
    %89 = arith.divf %87, %88 : vector<8x1xf32>
    %c0_35 = arith.constant 0 : index
    %c0_36 = arith.constant 0 : index
    %90 = vector.load %arg10[%c0_35, %c0_36] : memref<8x1xf32, #tpu.memory_space<vmem>>, vector<8x1xf32>
    tpu.vector_store %arg10[%c0_35, %c0_36], %89 {strides = array<i32>} : memref<8x1xf32, #tpu.memory_space<vmem>>, vector<8x1xf32>,
    return
  }
  func.func @transform_0(%arg0: i32) -> (i32, i32, i32, i32) {
    %c0_i32 = arith.constant 0 : i32
    %c0_i32_0 = arith.constant 0 : i32
    %c0_i32_1 = arith.constant 0 : i32
    %c0_i32_2 = arith.constant 0 : i32
    return %arg0, %c0_i32, %c0_i32_0, %c0_i32_1 : i32, i32, i32, i32
  }
  func.func @transform_1(%arg0: i32) -> (i32, i32) {
    %c0_i32 = arith.constant 0 : i32
    %c0_i32_0 = arith.constant 0 : i32
    %c0_i32_1 = arith.constant 0 : i32
    return %c0_i32, %c0_i32_0 : i32, i32
  }
  func.func @transform_2(%arg0: i32) -> (i32, i32) {
    %c0_i32 = arith.constant 0 : i32
    %c0_i32_0 = arith.constant 0 : i32
    %c0_i32_1 = arith.constant 0 : i32
    return %c0_i32, %c0_i32_0 : i32, i32
  }
  func.func @transform_3(%arg0: i32) -> (i32, i32) {
    %c0_i32 = arith.constant 0 : i32
    %c0_i32_0 = arith.constant 0 : i32
    %c0_i32_1 = arith.constant 0 : i32
    return %c0_i32, %c0_i32_0 : i32, i32
  }
  func.func @transform_4(%arg0: i32) -> (i32, i32) {
    %c0_i32 = arith.constant 0 : i32
    %c0_i32_0 = arith.constant 0 : i32
    %c0_i32_1 = arith.constant 0 : i32
    return %c0_i32, %c0_i32_0 : i32, i32
  }
  func.func @transform_5(%arg0: i32) -> (i32, i32) {
    %c0_i32 = arith.constant 0 : i32
    %c0_i32_0 = arith.constant 0 : i32
    %c0_i32_1 = arith.constant 0 : i32
    return %c0_i32, %c0_i32_0 : i32, i32
  }
  func.func @transform_6(%arg0: i32) -> (i32, i32) {
    %c0_i32 = arith.constant 0 : i32
    %c0_i32_0 = arith.constant 0 : i32
    %c0_i32_1 = arith.constant 0 : i32
    return %c0_i32, %c0_i32_0 : i32, i32
  }
  func.func @transform_7(%arg0: i32) -> (i32, i32) {
    %c0_i32 = arith.constant 0 : i32
    %c0_i32_0 = arith.constant 0 : i32
    %c0_i32_1 = arith.constant 0 : i32
    return %c0_i32, %c0_i32_0 : i32, i32
  }
  func.func @transform_8(%arg0: i32) -> (i32, i32) {
    %c0_i32 = arith.constant 0 : i32
    %c0_i32_0 = arith.constant 0 : i32
    %c0_i32_1 = arith.constant 0 : i32
    return %c0_i32, %c0_i32_0 : i32, i32
  }
  func.func @transform_9(%arg0: i32) -> (i32, i32) {
    %c0_i32 = arith.constant 0 : i32
    %c0_i32_0 = arith.constant 0 : i32
    return %arg0, %c0_i32 : i32, i32
  }
}

</mosaic_0001>

<llo_original>
// kernel: binary_cnn_forward.1
$region0: #{binary_cnn_forward.1}
  #allocation0 [shape = 'u32[]', space=smem, size = 0x4, offset = 0x4, fixed_abs, tag = 'smem constant byte address 0x4 - core index']
  #allocation1 [shape = 'u32[144,128]{1,0:T(1,128)}', space=vmem, size = 0x12000, scoped, tag = 'internal scratch']
  #allocation2 [shape = 'f32[1,1]{1,0:T(1,128)S(1)}', space=vmem, size = 0x200, scoped, tag = 'scoped memory for binary_cnn_forward.1']
  %s0 = inlined_call_operand.vmem [shape: bf16[16,3,16,24], index: 0, kind: input, shape index: {}]
  %s1 = inlined_call_operand.vmem [shape: bf16[24,256], index: 1, kind: input, shape index: {}]
  %s2 = inlined_call_operand.vmem [shape: f32[1,256], index: 2, kind: input, shape index: {}]
  %s3 = inlined_call_operand.vmem [shape: bf16[768,128], index: 3, kind: input, shape index: {}]
  %s4 = inlined_call_operand.vmem [shape: f32[1,128], index: 4, kind: input, shape index: {}]
  %s5 = inlined_call_operand.vmem [shape: bf16[128,64], index: 5, kind: input, shape index: {}]
  %s6 = inlined_call_operand.vmem [shape: f32[1,64], index: 6, kind: input, shape index: {}]
  %s7 = inlined_call_operand.vmem [shape: bf16[64,1], index: 7, kind: input, shape index: {}]
  %s8 = inlined_call_operand.<no memory space> [shape: f32[1,1], index: 8, kind: input, shape index: {}]
  %s9 = inlined_call_operand.vmem [shape: f32[16,1], index: 9, kind: output, shape index: {}]
  %s10 = sld [smem:[#allocation0]]
  $region69: #{binary_cnn_forward.1} parent=0
    _
  %s12 = ssub.s32 1, %s10
  %s13 = scalar_select 0, %s12, %s10
  %v14 = vstv %s8
  %15 = vst [vmem:[#allocation2] sm:$0x1] %v14
  loop: start=0, step=1, limit=4
  $region2: #{binary_cnn_forward.1} parent=0 // loop_pre_header
    _
  $region3: #{binary_cnn_forward.1} parent=0 // loop_header
    %s17 = sphi 0, %s21
    %p18 = scmp.ge.s32.totalorder %s17, 4
    %s27 = sphi 0, %s29
    %s30 = sphi 0, %s27
    %s31 = sphi 0, %s30
    %s47 = sphi 0, %s31
    %s51 = sphi 0, %s51
    %s53 = sphi 0, %s51
    %s54 = sphi 0, %s53
    %s68 = sphi 0, %s54
    %s72 = sphi 0, %s72
    %s74 = sphi 0, %s72
    %s75 = sphi 0, %s74
    %s89 = sphi 0, %s75
    %s93 = sphi 0, %s93
    %s95 = sphi 0, %s93
    %s96 = sphi 0, %s95
    %s110 = sphi 0, %s96
    %s114 = sphi 0, %s114
    %s116 = sphi 0, %s114
    %s117 = sphi 0, %s116
    %s131 = sphi 0, %s117
    %s135 = sphi 0, %s135
    %s137 = sphi 0, %s135
    %s138 = sphi 0, %s137
    %s152 = sphi 0, %s138
    %s156 = sphi 0, %s156
    %s158 = sphi 0, %s156
    %s159 = sphi 0, %s158
    %s173 = sphi 0, %s159
    %s177 = sphi 0, %s177
    %s179 = sphi 0, %s177
    %s180 = sphi 0, %s179
    %s194 = sphi 0, %s180
    %s198 = sphi 0, %s198
    %s200 = sphi 0, %s198
    %s201 = sphi 0, %s200
    %s215 = sphi 0, %s201
    %s221 = sphi 0, %s223
    %s224 = sphi 0, %s221
    %s225 = sphi 0, %s224
    %s241 = sphi 0, %s225
  $region4: #{binary_cnn_forward.1} parent=0 // loop_header_branch
    %20 = sbr.rel (%p18) target = $region8
  $region5: #{binary_cnn_forward.1} parent=0 // loop_body
    %s22 = ssub.s32 %s17, 1
    %s23 = ssub.s32 %s17, 2
    %s24 = sadd.s32 %s17, 1
    %s25 = ssub.s32 %s17, %s24
    %p26 = scmp.eq.s32.totalorder %s25, 0
    %s28 = sadd.s32 %s27, 1
    %s29 = scalar_select %p26, %s27, %s28
    %p32 = pneg %p26
    %p33 = scmp.eq.s32.totalorder %s17, 1
    %p34 = por %p32, %p33
    %p35 = scmp.ne.s32.totalorder %s27, %s30
    %p36 = scmp.eq.s32.totalorder %s17, 0
    %p37 = por %p35, %p36
    %p38 = scmp.ne.s32.totalorder %s27, %s30
    %p39 = scmp.eq.s32.totalorder %s22, 1
    %p40 = por %p38, %p39
    %p41 = scmp.ne.s32.totalorder %s30, %s31
    %p42 = scmp.eq.s32.totalorder %s22, 0
    %p43 = por %p41, %p42
    %p44 = scmp.ne.s32.totalorder %s30, %s31
    %p45 = scmp.eq.s32.totalorder %s23, 1
    %p46 = por %p44, %p45
    %p48 = scmp.ne.s32.totalorder %s31, %s47
    %p49 = scmp.eq.s32.totalorder %s23, 0
    %p50 = por %p48, %p49
    %s52 = sadd.s32 %s51, 1
    %p55 = scmp.eq.s32.totalorder %s17, 1
    %p56 = scmp.ne.s32.totalorder %s51, %s53
    %p57 = scmp.eq.s32.totalorder %s17, 0
    %p58 = por %p56, %p57
    %p59 = scmp.ne.s32.totalorder %s51, %s53
    %p60 = scmp.eq.s32.totalorder %s22, 1
    %p61 = por %p59, %p60
    %p62 = scmp.ne.s32.totalorder %s53, %s54
    %p63 = scmp.eq.s32.totalorder %s22, 0
    %p64 = por %p62, %p63
    %p65 = scmp.ne.s32.totalorder %s53, %s54
    %p66 = scmp.eq.s32.totalorder %s23, 1
    %p67 = por %p65, %p66
    %p69 = scmp.ne.s32.totalorder %s54, %s68
    %p70 = scmp.eq.s32.totalorder %s23, 0
    %p71 = por %p69, %p70
    %s73 = sadd.s32 %s72, 1
    %p76 = scmp.eq.s32.totalorder %s17, 1
    %p77 = scmp.ne.s32.totalorder %s72, %s74
    %p78 = scmp.eq.s32.totalorder %s17, 0
    %p79 = por %p77, %p78
    %p80 = scmp.ne.s32.totalorder %s72, %s74
    %p81 = scmp.eq.s32.totalorder %s22, 1
    %p82 = por %p80, %p81
    %p83 = scmp.ne.s32.totalorder %s74, %s75
    %p84 = scmp.eq.s32.totalorder %s22, 0
    %p85 = por %p83, %p84
    %p86 = scmp.ne.s32.totalorder %s74, %s75
    %p87 = scmp.eq.s32.totalorder %s23, 1
    %p88 = por %p86, %p87
    %p90 = scmp.ne.s32.totalorder %s75, %s89
    %p91 = scmp.eq.s32.totalorder %s23, 0
    %p92 = por %p90, %p91
    %s94 = sadd.s32 %s93, 1
    %p97 = scmp.eq.s32.totalorder %s17, 1
    %p98 = scmp.ne.s32.totalorder %s93, %s95
    %p99 = scmp.eq.s32.totalorder %s17, 0
    %p100 = por %p98, %p99
    %p101 = scmp.ne.s32.totalorder %s93, %s95
    %p102 = scmp.eq.s32.totalorder %s22, 1
    %p103 = por %p101, %p102
    %p104 = scmp.ne.s32.totalorder %s95, %s96
    %p105 = scmp.eq.s32.totalorder %s22, 0
    %p106 = por %p104, %p105
    %p107 = scmp.ne.s32.totalorder %s95, %s96
    %p108 = scmp.eq.s32.totalorder %s23, 1
    %p109 = por %p107, %p108
    %p111 = scmp.ne.s32.totalorder %s96, %s110
    %p112 = scmp.eq.s32.totalorder %s23, 0
    %p113 = por %p111, %p112
    %s115 = sadd.s32 %s114, 1
    %p118 = scmp.eq.s32.totalorder %s17, 1
    %p119 = scmp.ne.s32.totalorder %s114, %s116
    %p120 = scmp.eq.s32.totalorder %s17, 0
    %p121 = por %p119, %p120
    %p122 = scmp.ne.s32.totalorder %s114, %s116
    %p123 = scmp.eq.s32.totalorder %s22, 1
    %p124 = por %p122, %p123
    %p125 = scmp.ne.s32.totalorder %s116, %s117
    %p126 = scmp.eq.s32.totalorder %s22, 0
    %p127 = por %p125, %p126
    %p128 = scmp.ne.s32.totalorder %s116, %s117
    %p129 = scmp.eq.s32.totalorder %s23, 1
    %p130 = por %p128, %p129
    %p132 = scmp.ne.s32.totalorder %s117, %s131
    %p133 = scmp.eq.s32.totalorder %s23, 0
    %p134 = por %p132, %p133
    %s136 = sadd.s32 %s135, 1
    %p139 = scmp.eq.s32.totalorder %s17, 1
    %p140 = scmp.ne.s32.totalorder %s135, %s137
    %p141 = scmp.eq.s32.totalorder %s17, 0
    %p142 = por %p140, %p141
    %p143 = scmp.ne.s32.totalorder %s135, %s137
    %p144 = scmp.eq.s32.totalorder %s22, 1
    %p145 = por %p143, %p144
    %p146 = scmp.ne.s32.totalorder %s137, %s138
    %p147 = scmp.eq.s32.totalorder %s22, 0
    %p148 = por %p146, %p147
    %p149 = scmp.ne.s32.totalorder %s137, %s138
    %p150 = scmp.eq.s32.totalorder %s23, 1
    %p151 = por %p149, %p150
    %p153 = scmp.ne.s32.totalorder %s138, %s152
    %p154 = scmp.eq.s32.totalorder %s23, 0
    %p155 = por %p153, %p154
    %s157 = sadd.s32 %s156, 1
    %p160 = scmp.eq.s32.totalorder %s17, 1
    %p161 = scmp.ne.s32.totalorder %s156, %s158
    %p162 = scmp.eq.s32.totalorder %s17, 0
    %p163 = por %p161, %p162
    %p164 = scmp.ne.s32.totalorder %s156, %s158
    %p165 = scmp.eq.s32.totalorder %s22, 1
    %p166 = por %p164, %p165
    %p167 = scmp.ne.s32.totalorder %s158, %s159
    %p168 = scmp.eq.s32.totalorder %s22, 0
    %p169 = por %p167, %p168
    %p170 = scmp.ne.s32.totalorder %s158, %s159
    %p171 = scmp.eq.s32.totalorder %s23, 1
    %p172 = por %p170, %p171
    %p174 = scmp.ne.s32.totalorder %s159, %s173
    %p175 = scmp.eq.s32.totalorder %s23, 0
    %p176 = por %p174, %p175
    %s178 = sadd.s32 %s177, 1
    %p181 = scmp.eq.s32.totalorder %s17, 1
    %p182 = scmp.ne.s32.totalorder %s177, %s179
    %p183 = scmp.eq.s32.totalorder %s17, 0
    %p184 = por %p182, %p183
    %p185 = scmp.ne.s32.totalorder %s177, %s179
    %p186 = scmp.eq.s32.totalorder %s22, 1
    %p187 = por %p185, %p186
    %p188 = scmp.ne.s32.totalorder %s179, %s180
    %p189 = scmp.eq.s32.totalorder %s22, 0
    %p190 = por %p188, %p189
    %p191 = scmp.ne.s32.totalorder %s179, %s180
    %p192 = scmp.eq.s32.totalorder %s23, 1
    %p193 = por %p191, %p192
    %p195 = scmp.ne.s32.totalorder %s180, %s194
    %p196 = scmp.eq.s32.totalorder %s23, 0
    %p197 = por %p195, %p196
    %s199 = sadd.s32 %s198, 1
    %p202 = scmp.eq.s32.totalorder %s17, 1
    %p203 = scmp.ne.s32.totalorder %s198, %s200
    %p204 = scmp.eq.s32.totalorder %s17, 0
    %p205 = por %p203, %p204
    %p206 = scmp.ne.s32.totalorder %s198, %s200
    %p207 = scmp.eq.s32.totalorder %s22, 1
    %p208 = por %p206, %p207
    %p209 = scmp.ne.s32.totalorder %s200, %s201
    %p210 = scmp.eq.s32.totalorder %s22, 0
    %p211 = por %p209, %p210
    %p212 = scmp.ne.s32.totalorder %s200, %s201
    %p213 = scmp.eq.s32.totalorder %s23, 1
    %p214 = por %p212, %p213
    %p216 = scmp.ne.s32.totalorder %s201, %s215
    %p217 = scmp.eq.s32.totalorder %s23, 0
    %p218 = por %p216, %p217
    %s219 = ssub.s32 %s17, %s24
    %p220 = scmp.eq.s32.totalorder %s219, 0
    %s222 = sadd.s32 %s221, 1
    %s223 = scalar_select %p220, %s221, %s222
    %p226 = pneg %p220
    %p227 = scmp.eq.s32.totalorder %s17, 1
    %p228 = por %p226, %p227
    %p229 = scmp.ne.s32.totalorder %s221, %s224
    %p230 = scmp.eq.s32.totalorder %s17, 0
    %p231 = por %p229, %p230
    %p232 = scmp.ne.s32.totalorder %s221, %s224
    %p233 = scmp.eq.s32.totalorder %s22, 1
    %p234 = por %p232, %p233
    %p235 = scmp.ne.s32.totalorder %s224, %s225
    %p236 = scmp.eq.s32.totalorder %s22, 0
    %p237 = por %p235, %p236
    %p238 = scmp.ne.s32.totalorder %s224, %s225
    %p239 = scmp.eq.s32.totalorder %s23, 1
    %p240 = por %p238, %p239
    %p242 = scmp.ne.s32.totalorder %s225, %s241
    %p243 = scmp.eq.s32.totalorder %s23, 0
    %p244 = por %p242, %p243
    %p245 = scmp.le.s32.totalorder 1, %s17
    %p246 = scmp.lt.s32.totalorder %s17, 3
    %p247 = pnand %p245, %p246
    %p248 = pneg %p247
    // Predicated region
    $region9: #{binary_cnn_forward.1} parent=5 // pred_check
      _
    $region10: #{binary_cnn_forward.1} parent=5 // pred_check_branch
      %250 = sbr.rel (%p247) target = $region12
    $region11: #{binary_cnn_forward.1} parent=5 // pred_region
      %s251 = ssub.s32 %s17, 1
      // Predicated region
      $region13: #{binary_cnn_forward.1} parent=11 // pred_check
        %p252 = pneg %p64
      $region14: #{binary_cnn_forward.1} parent=11 // pred_check_branch
        %254 = sbr.rel (%p252) target = $region16
      $region15: #{binary_cnn_forward.1} parent=11 // pred_region
        _
      $region16: #{binary_cnn_forward.1} parent=11 // pred_fallthru
        _
      // Predicated region
      $region17: #{binary_cnn_forward.1} parent=11 // pred_check
        %p255 = pneg %p85
      $region18: #{binary_cnn_forward.1} parent=11 // pred_check_branch
        %257 = sbr.rel (%p255) target = $region20
      $region19: #{binary_cnn_forward.1} parent=11 // pred_region
        _
      $region20: #{binary_cnn_forward.1} parent=11 // pred_fallthru
        _
      // Predicated region
      $region21: #{binary_cnn_forward.1} parent=11 // pred_check
        %p258 = pneg %p106
      $region22: #{binary_cnn_forward.1} parent=11 // pred_check_branch
        %260 = sbr.rel (%p258) target = $region24
      $region23: #{binary_cnn_forward.1} parent=11 // pred_region
        _
      $region24: #{binary_cnn_forward.1} parent=11 // pred_fallthru
        _
      // Predicated region
      $region25: #{binary_cnn_forward.1} parent=11 // pred_check
        %p261 = pneg %p127
      $region26: #{binary_cnn_forward.1} parent=11 // pred_check_branch
        %263 = sbr.rel (%p261) target = $region28
      $region27: #{binary_cnn_forward.1} parent=11 // pred_region
        _
      $region28: #{binary_cnn_forward.1} parent=11 // pred_fallthru
        _
      // Predicated region
      $region29: #{binary_cnn_forward.1} parent=11 // pred_check
        %p264 = pneg %p148
      $region30: #{binary_cnn_forward.1} parent=11 // pred_check_branch
        %266 = sbr.rel (%p264) target = $region32
      $region31: #{binary_cnn_forward.1} parent=11 // pred_region
        _
      $region32: #{binary_cnn_forward.1} parent=11 // pred_fallthru
        _
      // Predicated region
      $region33: #{binary_cnn_forward.1} parent=11 // pred_check
        %p267 = pneg %p169
      $region34: #{binary_cnn_forward.1} parent=11 // pred_check_branch
        %269 = sbr.rel (%p267) target = $region36
      $region35: #{binary_cnn_forward.1} parent=11 // pred_region
        _
      $region36: #{binary_cnn_forward.1} parent=11 // pred_fallthru
        _
      // Predicated region
      $region37: #{binary_cnn_forward.1} parent=11 // pred_check
        %p270 = pneg %p190
      $region38: #{binary_cnn_forward.1} parent=11 // pred_check_branch
        %272 = sbr.rel (%p270) target = $region40
      $region39: #{binary_cnn_forward.1} parent=11 // pred_region
        _
      $region40: #{binary_cnn_forward.1} parent=11 // pred_fallthru
        _
      // Predicated region
      $region41: #{binary_cnn_forward.1} parent=11 // pred_check
        %p273 = pneg %p211
      $region42: #{binary_cnn_forward.1} parent=11 // pred_check_branch
        %275 = sbr.rel (%p273) target = $region44
      $region43: #{binary_cnn_forward.1} parent=11 // pred_region
        _
      $region44: #{binary_cnn_forward.1} parent=11 // pred_fallthru
        _
    $region12: #{binary_cnn_forward.1} parent=5 // pred_fallthru
      _
    %p276 = scmp.lt.s32.totalorder %s17, 2
    // Predicated region
    $region45: #{binary_cnn_forward.1} parent=5 // pred_check
      %p277 = pneg %p276
    $region46: #{binary_cnn_forward.1} parent=5 // pred_check_branch
      %279 = sbr.rel (%p277) target = $region48
    $region47: #{binary_cnn_forward.1} parent=5 // pred_region
      // Predicated region
      $region49: #{binary_cnn_forward.1} parent=47 // pred_check
        %p280 = pneg %p37
      $region50: #{binary_cnn_forward.1} parent=47 // pred_check_branch
        %282 = sbr.rel (%p280) target = $region52
      $region51: #{binary_cnn_forward.1} parent=47 // pred_region
        %s283 = smul.u32 8, %s17
        %p284 = scmp.lt.s32.totalorder %s283, 15
        %s285 = scalar_select %p284, %s283, 15
        %s286 = smul.addr %s285, 6
        %s287 = smul.addr %s286, 4
        %s288 = scalar_lea.vmem %s0, %s287
        %s289 = smul.u32 8, %s17
      $region52: #{binary_cnn_forward.1} parent=47 // pred_fallthru
        _
    $region48: #{binary_cnn_forward.1} parent=5 // pred_fallthru
      _
    %p290 = scmp.le.s32.totalorder 1, %s17
    %p291 = scmp.lt.s32.totalorder %s17, 3
    %p292 = pnand %p290, %p291
    %p293 = pneg %p292
    // Predicated region
    $region53: #{binary_cnn_forward.1} parent=5 // pred_check
      _
    $region54: #{binary_cnn_forward.1} parent=5 // pred_check_branch
      %295 = sbr.rel (%p292) target = $region56
    $region55: #{binary_cnn_forward.1} parent=5 // pred_region
      %s296 = ssub.s32 %s17, 1
      %s297 = smul.u32 8, %s22
      %p298 = scmp.lt.s32.totalorder %s297, 15
      %s299 = scalar_select %p298, %s297, 15
      %s300 = smul.addr %s299, 6
      %s301 = smul.addr %s300, 4
      %s302 = scalar_lea.vmem %s0, %s301
      %p303 = pneg %p43
      %p304 = pneg %p40
      %p305 = pneg %p64
      %p306 = pneg %p61
      %p307 = pneg %p85
      %p308 = pneg %p82
      %p309 = pneg %p106
      %p310 = pneg %p103
      %p311 = pneg %p127
      %p312 = pneg %p124
      %p313 = pneg %p148
      %p314 = pneg %p145
      %p315 = pneg %p169
      %p316 = pneg %p166
      %p317 = pneg %p190
      %p318 = pneg %p187
      %p319 = pneg %p211
      %p320 = pneg %p208
      %p321 = pneg %p237
      %p322 = pneg %p234
      %p323 = scmp.lt.s32.totalorder %s22, 1
      %s324 = scalar_select %p323, %s22, 1
      %s325 = smul.addr %s324, 8
      %s326 = scalar_lea.vmem %s9, %s325
      %s327 = smul.u32 8, %s22
      %p328 = scmp.lt.s32.totalorder %s327, 15
      %s329 = scalar_select %p328, %s327, 15
      %s330 = smul.addr %s329, 6
      %s331 = smul.addr %s330, 4
      %s332 = scalar_lea.vmem %s0, %s331
      %s333 = smul.u32 8, %s22
      %p334 = scmp.lt.s32.totalorder %s22, 1
      %s335 = scalar_select %p334, %s22, 1
      %s336 = smul.addr %s335, 8
      %s337 = scalar_lea.vmem %s9, %s336
      %v339 = vld [vmem:[%s332] sm:$0xf]
      %v340 = vld [vmem:[%s332 + $0x4] sm:$0xf]
      %v341 = vld [vmem:[%s332 + $0x8] sm:$0xf]
      %v342 = vld [vmem:[%s332 + $0xc] sm:$0xf]
      %v343 = vld [vmem:[%s332 + $0x10] sm:$0xf]
      %v344 = vld [vmem:[%s332 + $0x14] sm:$0xf]
      %v345 = vld [vmem:[%s332 + $0x18] sm:$0xf]
      %v346 = vld [vmem:[%s332 + $0x1c] sm:$0xf]
      %v347 = vld [vmem:[%s332 + $0x20] sm:$0xf]
      %v348 = vld [vmem:[%s332 + $0x24] sm:$0xf]
      %v349 = vld [vmem:[%s332 + $0x28] sm:$0xf]
      %v350 = vld [vmem:[%s332 + $0x2c] sm:$0xf]
      %v351 = vld [vmem:[%s332 + $0x30] sm:$0xf]
      %v352 = vld [vmem:[%s332 + $0x34] sm:$0xf]
      %v353 = vld [vmem:[%s332 + $0x38] sm:$0xf]
      %v354 = vld [vmem:[%s332 + $0x3c] sm:$0xf]
      %v355 = vld [vmem:[%s332 + $0x40] sm:$0xf]
      %v356 = vld [vmem:[%s332 + $0x44] sm:$0xf]
      %v357 = vld [vmem:[%s332 + $0x48] sm:$0xf]
      %v358 = vld [vmem:[%s332 + $0x4c] sm:$0xf]
      %v359 = vld [vmem:[%s332 + $0x50] sm:$0xf]
      %v360 = vld [vmem:[%s332 + $0x54] sm:$0xf]
      %v361 = vld [vmem:[%s332 + $0x58] sm:$0xf]
      %v362 = vld [vmem:[%s332 + $0x5c] sm:$0xf]
      %v363 = vld [vmem:[%s332 + $0x60] sm:$0xf]
      %v364 = vld [vmem:[%s332 + $0x64] sm:$0xf]
      %v365 = vld [vmem:[%s332 + $0x68] sm:$0xf]
      %v366 = vld [vmem:[%s332 + $0x6c] sm:$0xf]
      %v367 = vld [vmem:[%s332 + $0x70] sm:$0xf]
      %v368 = vld [vmem:[%s332 + $0x74] sm:$0xf]
      %v369 = vld [vmem:[%s332 + $0x78] sm:$0xf]
      %v370 = vld [vmem:[%s332 + $0x7c] sm:$0xf]
      %v371 = vld [vmem:[%s332 + $0x80] sm:$0xf]
      %v372 = vld [vmem:[%s332 + $0x84] sm:$0xf]
      %v373 = vld [vmem:[%s332 + $0x88] sm:$0xf]
      %v374 = vld [vmem:[%s332 + $0x8c] sm:$0xf]
      %v375 = vld [vmem:[%s332 + $0x90] sm:$0xf]
      %v376 = vld [vmem:[%s332 + $0x94] sm:$0xf]
      %v377 = vld [vmem:[%s332 + $0x98] sm:$0xf]
      %v378 = vld [vmem:[%s332 + $0x9c] sm:$0xf]
      %v379 = vld [vmem:[%s332 + $0xa0] sm:$0xf]
      %v380 = vld [vmem:[%s332 + $0xa4] sm:$0xf]
      %v381 = vld [vmem:[%s332 + $0xa8] sm:$0xf]
      %v382 = vld [vmem:[%s332 + $0xac] sm:$0xf]
      %v383 = vld [vmem:[%s332 + $0xb0] sm:$0xf]
      %v384 = vld [vmem:[%s332 + $0xb4] sm:$0xf]
      %v385 = vld [vmem:[%s332 + $0xb8] sm:$0xf]
      %v386 = vld [vmem:[%s332 + $0xbc] sm:$0xf]
      %v387 = vld [vmem:[%s1] sm:$0xff]
      %v388 = vld [vmem:[%s1 + $0x8] sm:$0xff]
      %v389 = vld [vmem:[%s1 + $0x10] sm:$0xff]
      %v390 = vld [vmem:[%s2] sm:$0x3]
      %v392 = vlaneseq
      %v393 = vshrl.u32 %v392, 7
      %v394 = vsub.s32 0, %v393
      %v395 = vrot.slane %v390, %v394
      %v396 = vlaneseq
      %v397 = vshrl.u32 %v396, 7
      %v398 = vsub.s32 1, %v397
      %v399 = vrot.slane %v390, %v398
      %v450 = vunpack.c.l.b16 %v339
      %v451 = vunpack.c.l.b16 %v340
      %v452 = vunpack.c.l.b16 %v341
      %v453 = vunpack.c.l.b16 %v342
      %v454 = vunpack.c.l.b16 %v343
      %v455 = vunpack.c.l.b16 %v344
      %v456 = vunpack.c.l.b16 %v345
      %v457 = vunpack.c.l.b16 %v346
      %v458 = vunpack.c.l.b16 %v347
      %v459 = vunpack.c.l.b16 %v348
      %v460 = vunpack.c.l.b16 %v349
      %v461 = vunpack.c.l.b16 %v350
      %v462 = vunpack.c.l.b16 %v351
      %v463 = vunpack.c.l.b16 %v352
      %v464 = vunpack.c.l.b16 %v353
      %v465 = vunpack.c.l.b16 %v354
      %v466 = vunpack.c.l.b16 %v355
      %v467 = vunpack.c.l.b16 %v356
      %v468 = vunpack.c.l.b16 %v357
      %v469 = vunpack.c.l.b16 %v358
      %v470 = vunpack.c.l.b16 %v359
      %v471 = vunpack.c.l.b16 %v360
      %v472 = vunpack.c.l.b16 %v361
      %v473 = vunpack.c.l.b16 %v362
      %v474 = vunpack.c.l.b16 %v363
      %v475 = vunpack.c.l.b16 %v364
      %v476 = vunpack.c.l.b16 %v365
      %v477 = vunpack.c.l.b16 %v366
      %v478 = vunpack.c.l.b16 %v367
      %v479 = vunpack.c.l.b16 %v368
      %v480 = vunpack.c.l.b16 %v369
      %v481 = vunpack.c.l.b16 %v370
      %v482 = vunpack.c.l.b16 %v371
      %v483 = vunpack.c.l.b16 %v372
      %v484 = vunpack.c.l.b16 %v373
      %v485 = vunpack.c.l.b16 %v374
      %v486 = vunpack.c.l.b16 %v375
      %v487 = vunpack.c.l.b16 %v376
      %v488 = vunpack.c.l.b16 %v377
      %v489 = vunpack.c.l.b16 %v378
      %v490 = vunpack.c.l.b16 %v379
      %v491 = vunpack.c.l.b16 %v380
      %v492 = vunpack.c.l.b16 %v381
      %v493 = vunpack.c.l.b16 %v382
      %v494 = vunpack.c.l.b16 %v383
      %v495 = vunpack.c.l.b16 %v384
      %v496 = vunpack.c.l.b16 %v385
      %v497 = vunpack.c.l.b16 %v386
      %v498 = vpack.c.b16 %v451, %v450
      %v499 = vpack.c.b16 %v453, %v452
      %v500 = vpack.c.b16 %v455, %v454
      %v501 = vpack.c.b16 %v457, %v456
      %v502 = vpack.c.b16 %v459, %v458
      %v503 = vpack.c.b16 %v461, %v460
      %v504 = vpack.c.b16 %v463, %v462
      %v505 = vpack.c.b16 %v465, %v464
      %v506 = vpack.c.b16 %v467, %v466
      %v507 = vpack.c.b16 %v469, %v468
      %v508 = vpack.c.b16 %v471, %v470
      %v509 = vpack.c.b16 %v473, %v472
      %v510 = vpack.c.b16 %v475, %v474
      %v511 = vpack.c.b16 %v477, %v476
      %v512 = vpack.c.b16 %v479, %v478
      %v513 = vpack.c.b16 %v481, %v480
      %v514 = vpack.c.b16 %v483, %v482
      %v515 = vpack.c.b16 %v485, %v484
      %v516 = vpack.c.b16 %v487, %v486
      %v517 = vpack.c.b16 %v489, %v488
      %v518 = vpack.c.b16 %v491, %v490
      %v519 = vpack.c.b16 %v493, %v492
      %v520 = vpack.c.b16 %v495, %v494
      %v521 = vpack.c.b16 %v497, %v496
      %v525 = vunpack.c.l.b16 %v387
      %v526 = vunpack.c.h.b16 %v387
      %v527 = vunpack.c.l.b16 %v388
      %v528 = vunpack.c.h.b16 %v388
      %v529 = vunpack.c.l.b16 %v389
      %v530 = vunpack.c.h.b16 %v389
      %v531 = vpack.c.b16 %v527, %v525
      %v532 = vpack.c.b16 %v528, %v526
      %v533 = vpack.c.b16 %v529, %v529
      %v534 = vpack.c.b16 %v530, %v530
      %vm537 = vcmask 195584
      %v539 = vsel %vm537, %v498, 0
      %v542 = vsel %vm537, %v499, 0
      %v545 = vsel %vm537, %v500, 0
      %v548 = vsel %vm537, %v501, 0
      %v551 = vsel %vm537, %v502, 0
      %v554 = vsel %vm537, %v503, 0
      %v557 = vsel %vm537, %v504, 0
      %v560 = vsel %vm537, %v505, 0
      %v563 = vsel %vm537, %v506, 0
      %v566 = vsel %vm537, %v507, 0
      %v569 = vsel %vm537, %v508, 0
      %v572 = vsel %vm537, %v509, 0
      %v575 = vsel %vm537, %v510, 0
      %v578 = vsel %vm537, %v511, 0
      %v581 = vsel %vm537, %v512, 0
      %v584 = vsel %vm537, %v513, 0
      %v587 = vsel %vm537, %v514, 0
      %v590 = vsel %vm537, %v515, 0
      %v593 = vsel %vm537, %v516, 0
      %v596 = vsel %vm537, %v517, 0
      %v599 = vsel %vm537, %v518, 0
      %v602 = vsel %vm537, %v519, 0
      %v605 = vsel %vm537, %v520, 0
      %v608 = vsel %vm537, %v521, 0
      %vm610 = vcmask 1043456
      %v612 = vsel %vm610, %v533, 0
      %v615 = vsel %vm610, %v534, 0
      %617 = vmatprep.subr.bf16.mxu0 %v532
      %618 = vmatpush1.bf16.msra.mxu0 %v531
      %619 = vmatprep.subr.bf16.mxu0 %v615
      %620 = vmatpush1.bf16.msra.mxu0 %v612
      %621 = vmatprep.subr.bf16.mxu0 0
      %622 = vmatpush1.bf16.msra.mxu0 0
      %623 = vmatprep.subr.bf16.mxu0 0
      %624 = vmatpush1.bf16.msra.mxu0 0
      %625 = vmatprep.subr.bf16.mxu0 0
      %626 = vmatpush1.bf16.msra.mxu0 0
      %627 = vmatprep.subr.bf16.mxu0 0
      %628 = vmatpush1.bf16.msra.mxu0 0
      %629 = vmatprep.subr.bf16.mxu0 0
      %630 = vmatpush1.bf16.msra.mxu0 0
      %631 = vmatprep.subr.bf16.mxu0 0
      %632 = vmatpush1.bf16.msra.mxu0 0
      %633 = vmatprep.subr.bf16.mxu0 0
      %634 = vmatpush1.bf16.msra.mxu0 0
      %635 = vmatprep.subr.bf16.mxu0 0
      %636 = vmatpush1.bf16.msra.mxu0 0
      %637 = vmatprep.subr.bf16.mxu0 0
      %638 = vmatpush1.bf16.msra.mxu0 0
      %639 = vmatprep.subr.bf16.mxu0 0
      %640 = vmatpush1.bf16.msra.mxu0 0
      %641 = vmatprep.subr.bf16.mxu0 0
      %642 = vmatpush1.bf16.msra.mxu0 0
      %643 = vmatprep.subr.bf16.mxu0 0
      %644 = vmatpush1.bf16.msra.mxu0 0
      %645 = vmatprep.subr.bf16.mxu0 0
      %646 = vmatpush1.bf16.msra.mxu0 0
      %647 = vmatprep.subr.bf16.mxu0 0
      %648 = vmatpush1.bf16.msra.mxu0 0
      %649 = vmatprep.mubr.bf16.mxu0 0
      %650 = vmatmul.mubr.bf16.gmra.mrb[0].mxu0 %v539
      %v651 = vpop.f32.mrb[0].mxu0
      %v652 = vadd.f32 %v395, %v651
      %v653 = vpop.f32.mrb[0].mxu0
      %v654 = vadd.f32 %v399, %v653
      %v655 = vpop.f32.mrb[0].mxu0
      %v656 = vpop.f32.mrb[0].mxu0
      %657 = vmatprep.mubr.bf16.mxu0 0
      %658 = vmatmul.mubr.bf16.gmra.mrb[0].mxu0 %v542
      %v659 = vpop.f32.mrb[0].mxu0
      %v660 = vadd.f32 %v395, %v659
      %v661 = vpop.f32.mrb[0].mxu0
      %v662 = vadd.f32 %v399, %v661
      %v663 = vpop.f32.mrb[0].mxu0
      %v664 = vpop.f32.mrb[0].mxu0
      %665 = vmatprep.mubr.bf16.mxu0 0
      %666 = vmatmul.mubr.bf16.gmra.mrb[0].mxu0 %v545
      %v667 = vpop.f32.mrb[0].mxu0
      %v668 = vadd.f32 %v395, %v667
      %v669 = vpop.f32.mrb[0].mxu0
      %v670 = vadd.f32 %v399, %v669
      %v671 = vpop.f32.mrb[0].mxu0
      %v672 = vpop.f32.mrb[0].mxu0
      %673 = vmatprep.mubr.bf16.mxu0 0
      %674 = vmatmul.mubr.bf16.gmra.mrb[0].mxu0 %v548
      %v675 = vpop.f32.mrb[0].mxu0
      %v676 = vadd.f32 %v395, %v675
      %v677 = vpop.f32.mrb[0].mxu0
      %v678 = vadd.f32 %v399, %v677
      %v679 = vpop.f32.mrb[0].mxu0
      %v680 = vpop.f32.mrb[0].mxu0
      %681 = vmatprep.mubr.bf16.mxu0 0
      %682 = vmatmul.mubr.bf16.gmra.mrb[0].mxu0 %v551
      %v683 = vpop.f32.mrb[0].mxu0
      %v684 = vadd.f32 %v395, %v683
      %v685 = vpop.f32.mrb[0].mxu0
      %v686 = vadd.f32 %v399, %v685
      %v687 = vpop.f32.mrb[0].mxu0
      %v688 = vpop.f32.mrb[0].mxu0
      %689 = vmatprep.mubr.bf16.mxu0 0
      %690 = vmatmul.mubr.bf16.gmra.mrb[0].mxu0 %v554
      %v691 = vpop.f32.mrb[0].mxu0
      %v692 = vadd.f32 %v395, %v691
      %v693 = vpop.f32.mrb[0].mxu0
      %v694 = vadd.f32 %v399, %v693
      %v695 = vpop.f32.mrb[0].mxu0
      %v696 = vpop.f32.mrb[0].mxu0
      %697 = vmatprep.mubr.bf16.mxu0 0
      %698 = vmatmul.mubr.bf16.gmra.mrb[0].mxu0 %v557
      %v699 = vpop.f32.mrb[0].mxu0
      %v700 = vadd.f32 %v395, %v699
      %v701 = vpop.f32.mrb[0].mxu0
      %v702 = vadd.f32 %v399, %v701
      %v703 = vpop.f32.mrb[0].mxu0
      %v704 = vpop.f32.mrb[0].mxu0
      %705 = vmatprep.mubr.bf16.mxu0 0
      %706 = vmatmul.mubr.bf16.gmra.mrb[0].mxu0 %v560
      %v707 = vpop.f32.mrb[0].mxu0
      %v708 = vadd.f32 %v395, %v707
      %v709 = vpop.f32.mrb[0].mxu0
      %v710 = vadd.f32 %v399, %v709
      %v711 = vpop.f32.mrb[0].mxu0
      %v712 = vpop.f32.mrb[0].mxu0
      %713 = vmatprep.mubr.bf16.mxu0 0
      %714 = vmatmul.mubr.bf16.gmra.mrb[0].mxu0 %v563
      %v715 = vpop.f32.mrb[0].mxu0
      %v716 = vadd.f32 %v395, %v715
      %v717 = vpop.f32.mrb[0].mxu0
      %v718 = vadd.f32 %v399, %v717
      %v719 = vpop.f32.mrb[0].mxu0
      %v720 = vpop.f32.mrb[0].mxu0
      %721 = vmatprep.mubr.bf16.mxu0 0
      %722 = vmatmul.mubr.bf16.gmra.mrb[0].mxu0 %v566
      %v723 = vpop.f32.mrb[0].mxu0
      %v724 = vadd.f32 %v395, %v723
      %v725 = vpop.f32.mrb[0].mxu0
      %v726 = vadd.f32 %v399, %v725
      %v727 = vpop.f32.mrb[0].mxu0
      %v728 = vpop.f32.mrb[0].mxu0
      %729 = vmatprep.mubr.bf16.mxu0 0
      %730 = vmatmul.mubr.bf16.gmra.mrb[0].mxu0 %v569
      %v731 = vpop.f32.mrb[0].mxu0
      %v732 = vadd.f32 %v395, %v731
      %v733 = vpop.f32.mrb[0].mxu0
      %v734 = vadd.f32 %v399, %v733
      %v735 = vpop.f32.mrb[0].mxu0
      %v736 = vpop.f32.mrb[0].mxu0
      %737 = vmatprep.mubr.bf16.mxu0 0
      %738 = vmatmul.mubr.bf16.gmra.mrb[0].mxu0 %v572
      %v739 = vpop.f32.mrb[0].mxu0
      %v740 = vadd.f32 %v395, %v739
      %v741 = vpop.f32.mrb[0].mxu0
      %v742 = vadd.f32 %v399, %v741
      %v743 = vpop.f32.mrb[0].mxu0
      %v744 = vpop.f32.mrb[0].mxu0
      %745 = vmatprep.mubr.bf16.mxu0 0
      %746 = vmatmul.mubr.bf16.gmra.mrb[0].mxu0 %v575
      %v747 = vpop.f32.mrb[0].mxu0
      %v748 = vadd.f32 %v395, %v747
      %v749 = vpop.f32.mrb[0].mxu0
      %v750 = vadd.f32 %v399, %v749
      %v751 = vpop.f32.mrb[0].mxu0
      %v752 = vpop.f32.mrb[0].mxu0
      %753 = vmatprep.mubr.bf16.mxu0 0
      %754 = vmatmul.mubr.bf16.gmra.mrb[0].mxu0 %v578
      %v755 = vpop.f32.mrb[0].mxu0
      %v756 = vadd.f32 %v395, %v755
      %v757 = vpop.f32.mrb[0].mxu0
      %v758 = vadd.f32 %v399, %v757
      %v759 = vpop.f32.mrb[0].mxu0
      %v760 = vpop.f32.mrb[0].mxu0
      %761 = vmatprep.mubr.bf16.mxu0 0
      %762 = vmatmul.mubr.bf16.gmra.mrb[0].mxu0 %v581
      %v763 = vpop.f32.mrb[0].mxu0
      %v764 = vadd.f32 %v395, %v763
      %v765 = vpop.f32.mrb[0].mxu0
      %v766 = vadd.f32 %v399, %v765
      %v767 = vpop.f32.mrb[0].mxu0
      %v768 = vpop.f32.mrb[0].mxu0
      %769 = vmatprep.mubr.bf16.mxu0 0
      %770 = vmatmul.mubr.bf16.gmra.mrb[0].mxu0 %v584
      %v771 = vpop.f32.mrb[0].mxu0
      %v772 = vadd.f32 %v395, %v771
      %v773 = vpop.f32.mrb[0].mxu0
      %v774 = vadd.f32 %v399, %v773
      %v775 = vpop.f32.mrb[0].mxu0
      %v776 = vpop.f32.mrb[0].mxu0
      %777 = vmatprep.mubr.bf16.mxu0 0
      %778 = vmatmul.mubr.bf16.gmra.mrb[0].mxu0 %v587
      %v779 = vpop.f32.mrb[0].mxu0
      %v780 = vadd.f32 %v395, %v779
      %v781 = vpop.f32.mrb[0].mxu0
      %v782 = vadd.f32 %v399, %v781
      %v783 = vpop.f32.mrb[0].mxu0
      %v784 = vpop.f32.mrb[0].mxu0
      %785 = vmatprep.mubr.bf16.mxu0 0
      %786 = vmatmul.mubr.bf16.gmra.mrb[0].mxu0 %v590
      %v787 = vpop.f32.mrb[0].mxu0
      %v788 = vadd.f32 %v395, %v787
      %v789 = vpop.f32.mrb[0].mxu0
      %v790 = vadd.f32 %v399, %v789
      %v791 = vpop.f32.mrb[0].mxu0
      %v792 = vpop.f32.mrb[0].mxu0
      %793 = vmatprep.mubr.bf16.mxu0 0
      %794 = vmatmul.mubr.bf16.gmra.mrb[0].mxu0 %v593
      %v795 = vpop.f32.mrb[0].mxu0
      %v796 = vadd.f32 %v395, %v795
      %v797 = vpop.f32.mrb[0].mxu0
      %v798 = vadd.f32 %v399, %v797
      %v799 = vpop.f32.mrb[0].mxu0
      %v800 = vpop.f32.mrb[0].mxu0
      %801 = vmatprep.mubr.bf16.mxu0 0
      %802 = vmatmul.mubr.bf16.gmra.mrb[0].mxu0 %v596
      %v803 = vpop.f32.mrb[0].mxu0
      %v804 = vadd.f32 %v395, %v803
      %v805 = vpop.f32.mrb[0].mxu0
      %v806 = vadd.f32 %v399, %v805
      %v807 = vpop.f32.mrb[0].mxu0
      %v808 = vpop.f32.mrb[0].mxu0
      %809 = vmatprep.mubr.bf16.mxu0 0
      %810 = vmatmul.mubr.bf16.gmra.mrb[0].mxu0 %v599
      %v811 = vpop.f32.mrb[0].mxu0
      %v812 = vadd.f32 %v395, %v811
      %v813 = vpop.f32.mrb[0].mxu0
      %v814 = vadd.f32 %v399, %v813
      %v815 = vpop.f32.mrb[0].mxu0
      %v816 = vpop.f32.mrb[0].mxu0
      %817 = vmatprep.mubr.bf16.mxu0 0
      %818 = vmatmul.mubr.bf16.gmra.mrb[0].mxu0 %v602
      %v819 = vpop.f32.mrb[0].mxu0
      %v820 = vadd.f32 %v395, %v819
      %v821 = vpop.f32.mrb[0].mxu0
      %v822 = vadd.f32 %v399, %v821
      %v823 = vpop.f32.mrb[0].mxu0
      %v824 = vpop.f32.mrb[0].mxu0
      %825 = vmatprep.mubr.bf16.mxu0 0
      %826 = vmatmul.mubr.bf16.gmra.mrb[0].mxu0 %v605
      %v827 = vpop.f32.mrb[0].mxu0
      %v828 = vadd.f32 %v395, %v827
      %v829 = vpop.f32.mrb[0].mxu0
      %v830 = vadd.f32 %v399, %v829
      %v831 = vpop.f32.mrb[0].mxu0
      %v832 = vpop.f32.mrb[0].mxu0
      %833 = vmatprep.mubr.bf16.mxu0 0
      %834 = vmatmul.mubr.bf16.gmra.mrb[0].mxu0 %v608
      %v835 = vpop.f32.mrb[0].mxu0
      %v836 = vadd.f32 %v395, %v835
      %v837 = vpop.f32.mrb[0].mxu0
      %v838 = vadd.f32 %v399, %v837
      %v839 = vpop.f32.mrb[0].mxu0
      %v840 = vpop.f32.mrb[0].mxu0
      %841 = vdwg.mxu0
      %v842 = vmax.f32 %v652, 0.0
      %v843 = vmax.f32 %v654, 0.0
      %v844 = vmax.f32 %v660, 0.0
      %v845 = vmax.f32 %v662, 0.0
      %v846 = vmax.f32 %v668, 0.0
      %v847 = vmax.f32 %v670, 0.0
      %v848 = vmax.f32 %v676, 0.0
      %v849 = vmax.f32 %v678, 0.0
      %v850 = vmax.f32 %v684, 0.0
      %v851 = vmax.f32 %v686, 0.0
      %v852 = vmax.f32 %v692, 0.0
      %v853 = vmax.f32 %v694, 0.0
      %v854 = vmax.f32 %v700, 0.0
      %v855 = vmax.f32 %v702, 0.0
      %v856 = vmax.f32 %v708, 0.0
      %v857 = vmax.f32 %v710, 0.0
      %v858 = vmax.f32 %v716, 0.0
      %v859 = vmax.f32 %v718, 0.0
      %v860 = vmax.f32 %v724, 0.0
      %v861 = vmax.f32 %v726, 0.0
      %v862 = vmax.f32 %v732, 0.0
      %v863 = vmax.f32 %v734, 0.0
      %v864 = vmax.f32 %v740, 0.0
      %v865 = vmax.f32 %v742, 0.0
      %v866 = vmax.f32 %v748, 0.0
      %v867 = vmax.f32 %v750, 0.0
      %v868 = vmax.f32 %v756, 0.0
      %v869 = vmax.f32 %v758, 0.0
      %v870 = vmax.f32 %v764, 0.0
      %v871 = vmax.f32 %v766, 0.0
      %v872 = vmax.f32 %v772, 0.0
      %v873 = vmax.f32 %v774, 0.0
      %v874 = vmax.f32 %v780, 0.0
      %v875 = vmax.f32 %v782, 0.0
      %v876 = vmax.f32 %v788, 0.0
      %v877 = vmax.f32 %v790, 0.0
      %v878 = vmax.f32 %v796, 0.0
      %v879 = vmax.f32 %v798, 0.0
      %v880 = vmax.f32 %v804, 0.0
      %v881 = vmax.f32 %v806, 0.0
      %v882 = vmax.f32 %v812, 0.0
      %v883 = vmax.f32 %v814, 0.0
      %v884 = vmax.f32 %v820, 0.0
      %v885 = vmax.f32 %v822, 0.0
      %v886 = vmax.f32 %v828, 0.0
      %v887 = vmax.f32 %v830, 0.0
      %v888 = vmax.f32 %v836, 0.0
      %v889 = vmax.f32 %v838, 0.0
      %v890 = vmax.f32 %v842, %v844
      %v891 = vmax.f32 %v843, %v845
      %v892 = vmax.f32 %v848, %v850
      %v893 = vmax.f32 %v849, %v851
      %v894 = vmax.f32 %v854, %v856
      %v895 = vmax.f32 %v855, %v857
      %v896 = vmax.f32 %v860, %v862
      %v897 = vmax.f32 %v861, %v863
      %v898 = vmax.f32 %v866, %v868
      %v899 = vmax.f32 %v867, %v869
      %v900 = vmax.f32 %v872, %v874
      %v901 = vmax.f32 %v873, %v875
      %v902 = vmax.f32 %v878, %v880
      %v903 = vmax.f32 %v879, %v881
      %v904 = vmax.f32 %v884, %v886
      %v905 = vmax.f32 %v885, %v887
      %v906 = vmax.f32 %v890, %v846
      %v907 = vmax.f32 %v891, %v847
      %v908 = vmax.f32 %v892, %v852
      %v909 = vmax.f32 %v893, %v853
      %v910 = vmax.f32 %v894, %v858
      %v911 = vmax.f32 %v895, %v859
      %v912 = vmax.f32 %v896, %v864
      %v913 = vmax.f32 %v897, %v865
      %v914 = vmax.f32 %v898, %v870
      %v915 = vmax.f32 %v899, %v871
      %v916 = vmax.f32 %v900, %v876
      %v917 = vmax.f32 %v901, %v877
      %v918 = vmax.f32 %v902, %v882
      %v919 = vmax.f32 %v903, %v883
      %v920 = vmax.f32 %v904, %v888
      %v921 = vmax.f32 %v905, %v889
      %v938 = vrot.slane %v906, 1
      %v939 = vrot.slane %v907, 1
      %v940 = vrot.slane %v908, 1
      %v941 = vrot.slane %v909, 1
      %v942 = vrot.slane %v910, 1
      %v943 = vrot.slane %v911, 1
      %v944 = vrot.slane %v912, 1
      %v945 = vrot.slane %v913, 1
      %v946 = vrot.slane %v914, 1
      %v947 = vrot.slane %v915, 1
      %v948 = vrot.slane %v916, 1
      %v949 = vrot.slane %v917, 1
      %v950 = vrot.slane %v918, 1
      %v951 = vrot.slane %v919, 1
      %v952 = vrot.slane %v920, 1
      %v953 = vrot.slane %v921, 1
      %v970 = vrot.slane %v906, 2
      %v971 = vrot.slane %v907, 2
      %v972 = vrot.slane %v908, 2
      %v973 = vrot.slane %v909, 2
      %v974 = vrot.slane %v910, 2
      %v975 = vrot.slane %v911, 2
      %v976 = vrot.slane %v912, 2
      %v977 = vrot.slane %v913, 2
      %v978 = vrot.slane %v914, 2
      %v979 = vrot.slane %v915, 2
      %v980 = vrot.slane %v916, 2
      %v981 = vrot.slane %v917, 2
      %v982 = vrot.slane %v918, 2
      %v983 = vrot.slane %v919, 2
      %v984 = vrot.slane %v920, 2
      %v985 = vrot.slane %v921, 2
      %vm1002 = vcmask 1045504
      %v1003 = vsel %vm1002, %v906, 0.0
      %v1004 = vsel %vm1002, %v907, 0.0
      %v1005 = vsel %vm1002, %v938, 0.0
      %v1006 = vsel %vm1002, %v939, 0.0
      %v1007 = vsel %vm1002, %v970, 0.0
      %v1008 = vsel %vm1002, %v971, 0.0
      %v1009 = vsel %vm1002, %v908, 0.0
      %v1010 = vsel %vm1002, %v909, 0.0
      %v1011 = vsel %vm1002, %v940, 0.0
      %v1012 = vsel %vm1002, %v941, 0.0
      %v1013 = vsel %vm1002, %v972, 0.0
      %v1014 = vsel %vm1002, %v973, 0.0
      %v1015 = vsel %vm1002, %v910, 0.0
      %v1016 = vsel %vm1002, %v911, 0.0
      %v1017 = vsel %vm1002, %v942, 0.0
      %v1018 = vsel %vm1002, %v943, 0.0
      %v1019 = vsel %vm1002, %v974, 0.0
      %v1020 = vsel %vm1002, %v975, 0.0
      %v1021 = vsel %vm1002, %v912, 0.0
      %v1022 = vsel %vm1002, %v913, 0.0
      %v1023 = vsel %vm1002, %v944, 0.0
      %v1024 = vsel %vm1002, %v945, 0.0
      %v1025 = vsel %vm1002, %v976, 0.0
      %v1026 = vsel %vm1002, %v977, 0.0
      %v1027 = vsel %vm1002, %v914, 0.0
      %v1028 = vsel %vm1002, %v915, 0.0
      %v1029 = vsel %vm1002, %v946, 0.0
      %v1030 = vsel %vm1002, %v947, 0.0
      %v1031 = vsel %vm1002, %v978, 0.0
      %v1032 = vsel %vm1002, %v979, 0.0
      %v1033 = vsel %vm1002, %v916, 0.0
      %v1034 = vsel %vm1002, %v917, 0.0
      %v1035 = vsel %vm1002, %v948, 0.0
      %v1036 = vsel %vm1002, %v949, 0.0
      %v1037 = vsel %vm1002, %v980, 0.0
      %v1038 = vsel %vm1002, %v981, 0.0
      %v1039 = vsel %vm1002, %v918, 0.0
      %v1040 = vsel %vm1002, %v919, 0.0
      %v1041 = vsel %vm1002, %v950, 0.0
      %v1042 = vsel %vm1002, %v951, 0.0
      %v1043 = vsel %vm1002, %v982, 0.0
      %v1044 = vsel %vm1002, %v983, 0.0
      %v1045 = vsel %vm1002, %v920, 0.0
      %v1046 = vsel %vm1002, %v921, 0.0
      %v1047 = vsel %vm1002, %v952, 0.0
      %v1048 = vsel %vm1002, %v953, 0.0
      %v1049 = vsel %vm1002, %v984, 0.0
      %v1050 = vsel %vm1002, %v985, 0.0
      %v1051 = vpack.c.bf16 %v1003, %v1003
      %v1052 = vpack.c.bf16 %v1004, %v1004
      %v1053 = vpack.c.bf16 %v1005, %v1005
      %v1054 = vpack.c.bf16 %v1006, %v1006
      %v1055 = vpack.c.bf16 %v1007, %v1007
      %v1056 = vpack.c.bf16 %v1008, %v1008
      %v1057 = vpack.c.bf16 %v1009, %v1009
      %v1058 = vpack.c.bf16 %v1010, %v1010
      %v1059 = vpack.c.bf16 %v1011, %v1011
      %v1060 = vpack.c.bf16 %v1012, %v1012
      %v1061 = vpack.c.bf16 %v1013, %v1013
      %v1062 = vpack.c.bf16 %v1014, %v1014
      %v1063 = vpack.c.bf16 %v1015, %v1015
      %v1064 = vpack.c.bf16 %v1016, %v1016
      %v1065 = vpack.c.bf16 %v1017, %v1017
      %v1066 = vpack.c.bf16 %v1018, %v1018
      %v1067 = vpack.c.bf16 %v1019, %v1019
      %v1068 = vpack.c.bf16 %v1020, %v1020
      %v1069 = vpack.c.bf16 %v1021, %v1021
      %v1070 = vpack.c.bf16 %v1022, %v1022
      %v1071 = vpack.c.bf16 %v1023, %v1023
      %v1072 = vpack.c.bf16 %v1024, %v1024
      %v1073 = vpack.c.bf16 %v1025, %v1025
      %v1074 = vpack.c.bf16 %v1026, %v1026
      %v1075 = vpack.c.bf16 %v1027, %v1027
      %v1076 = vpack.c.bf16 %v1028, %v1028
      %v1077 = vpack.c.bf16 %v1029, %v1029
      %v1078 = vpack.c.bf16 %v1030, %v1030
      %v1079 = vpack.c.bf16 %v1031, %v1031
      %v1080 = vpack.c.bf16 %v1032, %v1032
      %v1081 = vpack.c.bf16 %v1033, %v1033
      %v1082 = vpack.c.bf16 %v1034, %v1034
      %v1083 = vpack.c.bf16 %v1035, %v1035
      %v1084 = vpack.c.bf16 %v1036, %v1036
      %v1085 = vpack.c.bf16 %v1037, %v1037
      %v1086 = vpack.c.bf16 %v1038, %v1038
      %v1087 = vpack.c.bf16 %v1039, %v1039
      %v1088 = vpack.c.bf16 %v1040, %v1040
      %v1089 = vpack.c.bf16 %v1041, %v1041
      %v1090 = vpack.c.bf16 %v1042, %v1042
      %v1091 = vpack.c.bf16 %v1043, %v1043
      %v1092 = vpack.c.bf16 %v1044, %v1044
      %v1093 = vpack.c.bf16 %v1045, %v1045
      %v1094 = vpack.c.bf16 %v1046, %v1046
      %v1095 = vpack.c.bf16 %v1047, %v1047
      %v1096 = vpack.c.bf16 %v1048, %v1048
      %v1097 = vpack.c.bf16 %v1049, %v1049
      %v1098 = vpack.c.bf16 %v1050, %v1050
      %v1147 = vunpack.c.l.b16 %v1051
      %v1148 = vunpack.c.l.b16 %v1052
      %v1149 = vunpack.c.l.b16 %v1053
      %v1150 = vunpack.c.l.b16 %v1054
      %v1151 = vunpack.c.l.b16 %v1055
      %v1152 = vunpack.c.l.b16 %v1056
      %v1153 = vunpack.c.l.b16 %v1057
      %v1154 = vunpack.c.l.b16 %v1058
      %v1155 = vunpack.c.l.b16 %v1059
      %v1156 = vunpack.c.l.b16 %v1060
      %v1157 = vunpack.c.l.b16 %v1061
      %v1158 = vunpack.c.l.b16 %v1062
      %v1159 = vunpack.c.l.b16 %v1063
      %v1160 = vunpack.c.l.b16 %v1064
      %v1161 = vunpack.c.l.b16 %v1065
      %v1162 = vunpack.c.l.b16 %v1066
      %v1163 = vunpack.c.l.b16 %v1067
      %v1164 = vunpack.c.l.b16 %v1068
      %v1165 = vunpack.c.l.b16 %v1069
      %v1166 = vunpack.c.l.b16 %v1070
      %v1167 = vunpack.c.l.b16 %v1071
      %v1168 = vunpack.c.l.b16 %v1072
      %v1169 = vunpack.c.l.b16 %v1073
      %v1170 = vunpack.c.l.b16 %v1074
      %v1171 = vunpack.c.l.b16 %v1075
      %v1172 = vunpack.c.l.b16 %v1076
      %v1173 = vunpack.c.l.b16 %v1077
      %v1174 = vunpack.c.l.b16 %v1078
      %v1175 = vunpack.c.l.b16 %v1079
      %v1176 = vunpack.c.l.b16 %v1080
      %v1177 = vunpack.c.l.b16 %v1081
      %v1178 = vunpack.c.l.b16 %v1082
      %v1179 = vunpack.c.l.b16 %v1083
      %v1180 = vunpack.c.l.b16 %v1084
      %v1181 = vunpack.c.l.b16 %v1085
      %v1182 = vunpack.c.l.b16 %v1086
      %v1183 = vunpack.c.l.b16 %v1087
      %v1184 = vunpack.c.l.b16 %v1088
      %v1185 = vunpack.c.l.b16 %v1089
      %v1186 = vunpack.c.l.b16 %v1090
      %v1187 = vunpack.c.l.b16 %v1091
      %v1188 = vunpack.c.l.b16 %v1092
      %v1189 = vunpack.c.l.b16 %v1093
      %v1190 = vunpack.c.l.b16 %v1094
      %v1191 = vunpack.c.l.b16 %v1095
      %v1192 = vunpack.c.l.b16 %v1096
      %v1193 = vunpack.c.l.b16 %v1097
      %v1194 = vunpack.c.l.b16 %v1098
      %v1195 = vld [vmem:[%s3] sm:$0xf]
      %v1196 = vld [vmem:[%s3 + $0x4] sm:$0xf]
      %v1197 = vld [vmem:[%s3 + $0x8] sm:$0xf]
      %v1198 = vld [vmem:[%s3 + $0xc] sm:$0xf]
      %v1199 = vld [vmem:[%s3 + $0x10] sm:$0xf]
      %v1200 = vld [vmem:[%s3 + $0x14] sm:$0xf]
      %v1201 = vld [vmem:[%s3 + $0x18] sm:$0xf]
      %v1202 = vld [vmem:[%s3 + $0x1c] sm:$0xf]
      %v1203 = vld [vmem:[%s3 + $0x20] sm:$0xf]
      %v1204 = vld [vmem:[%s3 + $0x24] sm:$0xf]
      %v1205 = vld [vmem:[%s3 + $0x28] sm:$0xf]
      %v1206 = vld [vmem:[%s3 + $0x2c] sm:$0xf]
      %v1207 = vld [vmem:[%s3 + $0x30] sm:$0xf]
      %v1208 = vld [vmem:[%s3 + $0x34] sm:$0xf]
      %v1209 = vld [vmem:[%s3 + $0x38] sm:$0xf]
      %v1210 = vld [vmem:[%s3 + $0x3c] sm:$0xf]
      %v1211 = vld [vmem:[%s3 + $0x40] sm:$0xf]
      %v1212 = vld [vmem:[%s3 + $0x44] sm:$0xf]
      %v1213 = vld [vmem:[%s3 + $0x48] sm:$0xf]
      %v1214 = vld [vmem:[%s3 + $0x4c] sm:$0xf]
      %v1215 = vld [vmem:[%s3 + $0x50] sm:$0xf]
      %v1216 = vld [vmem:[%s3 + $0x54] sm:$0xf]
      %v1217 = vld [vmem:[%s3 + $0x58] sm:$0xf]
      %v1218 = vld [vmem:[%s3 + $0x5c] sm:$0xf]
      %v1219 = vld [vmem:[%s3 + $0x60] sm:$0xf]
      %v1220 = vld [vmem:[%s3 + $0x64] sm:$0xf]
      %v1221 = vld [vmem:[%s3 + $0x68] sm:$0xf]
      %v1222 = vld [vmem:[%s3 + $0x6c] sm:$0xf]
      %v1223 = vld [vmem:[%s3 + $0x70] sm:$0xf]
      %v1224 = vld [vmem:[%s3 + $0x74] sm:$0xf]
      %v1225 = vld [vmem:[%s3 + $0x78] sm:$0xf]
      %v1226 = vld [vmem:[%s3 + $0x7c] sm:$0xf]
      %v1227 = vld [vmem:[%s3 + $0x80] sm:$0xf]
      %v1228 = vld [vmem:[%s3 + $0x84] sm:$0xf]
      %v1229 = vld [vmem:[%s3 + $0x88] sm:$0xf]
      %v1230 = vld [vmem:[%s3 + $0x8c] sm:$0xf]
      %v1231 = vld [vmem:[%s3 + $0x90] sm:$0xf]
      %v1232 = vld [vmem:[%s3 + $0x94] sm:$0xf]
      %v1233 = vld [vmem:[%s3 + $0x98] sm:$0xf]
      %v1234 = vld [vmem:[%s3 + $0x9c] sm:$0xf]
      %v1235 = vld [vmem:[%s3 + $0xa0] sm:$0xf]
      %v1236 = vld [vmem:[%s3 + $0xa4] sm:$0xf]
      %v1237 = vld [vmem:[%s3 + $0xa8] sm:$0xf]
      %v1238 = vld [vmem:[%s3 + $0xac] sm:$0xf]
      %v1239 = vld [vmem:[%s3 + $0xb0] sm:$0xf]
      %v1240 = vld [vmem:[%s3 + $0xb4] sm:$0xf]
      %v1241 = vld [vmem:[%s3 + $0xb8] sm:$0xf]
      %v1242 = vld [vmem:[%s3 + $0xbc] sm:$0xf]
      %v1243 = vld [vmem:[%s3 + $0xc0] sm:$0xf]
      %v1244 = vld [vmem:[%s3 + $0xc4] sm:$0xf]
      %v1245 = vld [vmem:[%s3 + $0xc8] sm:$0xf]
      %v1246 = vld [vmem:[%s3 + $0xcc] sm:$0xf]
      %v1247 = vld [vmem:[%s3 + $0xd0] sm:$0xf]
      %v1248 = vld [vmem:[%s3 + $0xd4] sm:$0xf]
      %v1249 = vld [vmem:[%s3 + $0xd8] sm:$0xf]
      %v1250 = vld [vmem:[%s3 + $0xdc] sm:$0xf]
      %v1251 = vld [vmem:[%s3 + $0xe0] sm:$0xf]
      %v1252 = vld [vmem:[%s3 + $0xe4] sm:$0xf]
      %v1253 = vld [vmem:[%s3 + $0xe8] sm:$0xf]
      %v1254 = vld [vmem:[%s3 + $0xec] sm:$0xf]
      %v1255 = vld [vmem:[%s3 + $0xf0] sm:$0xf]
      %v1256 = vld [vmem:[%s3 + $0xf4] sm:$0xf]
      %v1257 = vld [vmem:[%s3 + $0xf8] sm:$0xf]
      %v1258 = vld [vmem:[%s3 + $0xfc] sm:$0xf]
      %v1259 = vld [vmem:[%s3 + $0x100] sm:$0xf]
      %v1260 = vld [vmem:[%s3 + $0x104] sm:$0xf]
      %v1261 = vld [vmem:[%s3 + $0x108] sm:$0xf]
      %v1262 = vld [vmem:[%s3 + $0x10c] sm:$0xf]
      %v1263 = vld [vmem:[%s3 + $0x110] sm:$0xf]
      %v1264 = vld [vmem:[%s3 + $0x114] sm:$0xf]
      %v1265 = vld [vmem:[%s3 + $0x118] sm:$0xf]
      %v1266 = vld [vmem:[%s3 + $0x11c] sm:$0xf]
      %v1267 = vld [vmem:[%s3 + $0x120] sm:$0xf]
      %v1268 = vld [vmem:[%s3 + $0x124] sm:$0xf]
      %v1269 = vld [vmem:[%s3 + $0x128] sm:$0xf]
      %v1270 = vld [vmem:[%s3 + $0x12c] sm:$0xf]
      %v1271 = vld [vmem:[%s3 + $0x130] sm:$0xf]
      %v1272 = vld [vmem:[%s3 + $0x134] sm:$0xf]
      %v1273 = vld [vmem:[%s3 + $0x138] sm:$0xf]
      %v1274 = vld [vmem:[%s3 + $0x13c] sm:$0xf]
      %v1275 = vld [vmem:[%s3 + $0x140] sm:$0xf]
      %v1276 = vld [vmem:[%s3 + $0x144] sm:$0xf]
      %v1277 = vld [vmem:[%s3 + $0x148] sm:$0xf]
      %v1278 = vld [vmem:[%s3 + $0x14c] sm:$0xf]
      %v1279 = vld [vmem:[%s3 + $0x150] sm:$0xf]
      %v1280 = vld [vmem:[%s3 + $0x154] sm:$0xf]
      %v1281 = vld [vmem:[%s3 + $0x158] sm:$0xf]
      %v1282 = vld [vmem:[%s3 + $0x15c] sm:$0xf]
      %v1283 = vld [vmem:[%s3 + $0x160] sm:$0xf]
      %v1284 = vld [vmem:[%s3 + $0x164] sm:$0xf]
      %v1285 = vld [vmem:[%s3 + $0x168] sm:$0xf]
      %v1286 = vld [vmem:[%s3 + $0x16c] sm:$0xf]
      %v1287 = vld [vmem:[%s3 + $0x170] sm:$0xf]
      %v1288 = vld [vmem:[%s3 + $0x174] sm:$0xf]
      %v1289 = vld [vmem:[%s3 + $0x178] sm:$0xf]
      %v1290 = vld [vmem:[%s3 + $0x17c] sm:$0xf]
      %v1291 = vld [vmem:[%s4] sm:$0x1]
      %v1293 = vlaneseq
      %v1294 = vshrl.u32 %v1293, 7
      %v1295 = vsub.s32 0, %v1294
      %v1296 = vrot.slane %v1291, %v1295
      %v1298 = vpack.c.b16 %v1153, %v1147
      %v1299 = vpack.c.b16 %v1154, %v1148
      %v1300 = vpack.c.b16 %v1155, %v1149
      %v1301 = vpack.c.b16 %v1156, %v1150
      %v1302 = vpack.c.b16 %v1157, %v1151
      %v1303 = vpack.c.b16 %v1158, %v1152
      %v1304 = vpack.c.b16 %v1165, %v1159
      %v1305 = vpack.c.b16 %v1166, %v1160
      %v1306 = vpack.c.b16 %v1167, %v1161
      %v1307 = vpack.c.b16 %v1168, %v1162
      %v1308 = vpack.c.b16 %v1169, %v1163
      %v1309 = vpack.c.b16 %v1170, %v1164
      %v1310 = vpack.c.b16 %v1177, %v1171
      %v1311 = vpack.c.b16 %v1178, %v1172
      %v1312 = vpack.c.b16 %v1179, %v1173
      %v1313 = vpack.c.b16 %v1180, %v1174
      %v1314 = vpack.c.b16 %v1181, %v1175
      %v1315 = vpack.c.b16 %v1182, %v1176
      %v1316 = vpack.c.b16 %v1189, %v1183
      %v1317 = vpack.c.b16 %v1190, %v1184
      %v1318 = vpack.c.b16 %v1191, %v1185
      %v1319 = vpack.c.b16 %v1192, %v1186
      %v1320 = vpack.c.b16 %v1193, %v1187
      %v1321 = vpack.c.b16 %v1194, %v1188
      %v1442 = vunpack.c.l.b16 %v1195
      %v1443 = vunpack.c.l.b16 %v1196
      %v1444 = vunpack.c.l.b16 %v1197
      %v1445 = vunpack.c.l.b16 %v1198
      %v1446 = vunpack.c.l.b16 %v1199
      %v1447 = vunpack.c.l.b16 %v1200
      %v1448 = vunpack.c.l.b16 %v1201
      %v1449 = vunpack.c.l.b16 %v1202
      %v1450 = vunpack.c.l.b16 %v1203
      %v1451 = vunpack.c.l.b16 %v1204
      %v1452 = vunpack.c.l.b16 %v1205
      %v1453 = vunpack.c.l.b16 %v1206
      %v1454 = vunpack.c.l.b16 %v1207
      %v1455 = vunpack.c.l.b16 %v1208
      %v1456 = vunpack.c.l.b16 %v1209
      %v1457 = vunpack.c.l.b16 %v1210
      %v1458 = vunpack.c.l.b16 %v1211
      %v1459 = vunpack.c.l.b16 %v1212
      %v1460 = vunpack.c.l.b16 %v1213
      %v1461 = vunpack.c.l.b16 %v1214
      %v1462 = vunpack.c.l.b16 %v1215
      %v1463 = vunpack.c.l.b16 %v1216
      %v1464 = vunpack.c.l.b16 %v1217
      %v1465 = vunpack.c.l.b16 %v1218
      %v1466 = vunpack.c.l.b16 %v1219
      %v1467 = vunpack.c.l.b16 %v1220
      %v1468 = vunpack.c.l.b16 %v1221
      %v1469 = vunpack.c.l.b16 %v1222
      %v1470 = vunpack.c.l.b16 %v1223
      %v1471 = vunpack.c.l.b16 %v1224
      %v1472 = vunpack.c.l.b16 %v1225
      %v1473 = vunpack.c.l.b16 %v1226
      %v1474 = vunpack.c.l.b16 %v1227
      %v1475 = vunpack.c.l.b16 %v1228
      %v1476 = vunpack.c.l.b16 %v1229
      %v1477 = vunpack.c.l.b16 %v1230
      %v1478 = vunpack.c.l.b16 %v1231
      %v1479 = vunpack.c.l.b16 %v1232
      %v1480 = vunpack.c.l.b16 %v1233
      %v1481 = vunpack.c.l.b16 %v1234
      %v1482 = vunpack.c.l.b16 %v1235
      %v1483 = vunpack.c.l.b16 %v1236
      %v1484 = vunpack.c.l.b16 %v1237
      %v1485 = vunpack.c.l.b16 %v1238
      %v1486 = vunpack.c.l.b16 %v1239
      %v1487 = vunpack.c.l.b16 %v1240
      %v1488 = vunpack.c.l.b16 %v1241
      %v1489 = vunpack.c.l.b16 %v1242
      %v1490 = vunpack.c.l.b16 %v1243
      %v1491 = vunpack.c.l.b16 %v1244
      %v1492 = vunpack.c.l.b16 %v1245
      %v1493 = vunpack.c.l.b16 %v1246
      %v1494 = vunpack.c.l.b16 %v1247
      %v1495 = vunpack.c.l.b16 %v1248
      %v1496 = vunpack.c.l.b16 %v1249
      %v1497 = vunpack.c.l.b16 %v1250
      %v1498 = vunpack.c.l.b16 %v1251
      %v1499 = vunpack.c.l.b16 %v1252
      %v1500 = vunpack.c.l.b16 %v1253
      %v1501 = vunpack.c.l.b16 %v1254
      %v1502 = vunpack.c.l.b16 %v1255
      %v1503 = vunpack.c.l.b16 %v1256
      %v1504 = vunpack.c.l.b16 %v1257
      %v1505 = vunpack.c.l.b16 %v1258
      %v1506 = vunpack.c.l.b16 %v1259
      %v1507 = vunpack.c.l.b16 %v1260
      %v1508 = vunpack.c.l.b16 %v1261
      %v1509 = vunpack.c.l.b16 %v1262
      %v1510 = vunpack.c.l.b16 %v1263
      %v1511 = vunpack.c.l.b16 %v1264
      %v1512 = vunpack.c.l.b16 %v1265
      %v1513 = vunpack.c.l.b16 %v1266
      %v1514 = vunpack.c.l.b16 %v1267
      %v1515 = vunpack.c.l.b16 %v1268
      %v1516 = vunpack.c.l.b16 %v1269
      %v1517 = vunpack.c.l.b16 %v1270
      %v1518 = vunpack.c.l.b16 %v1271
      %v1519 = vunpack.c.l.b16 %v1272
      %v1520 = vunpack.c.l.b16 %v1273
      %v1521 = vunpack.c.l.b16 %v1274
      %v1522 = vunpack.c.l.b16 %v1275
      %v1523 = vunpack.c.l.b16 %v1276
      %v1524 = vunpack.c.l.b16 %v1277
      %v1525 = vunpack.c.l.b16 %v1278
      %v1526 = vunpack.c.l.b16 %v1279
      %v1527 = vunpack.c.l.b16 %v1280
      %v1528 = vunpack.c.l.b16 %v1281
      %v1529 = vunpack.c.l.b16 %v1282
      %v1530 = vunpack.c.l.b16 %v1283
      %v1531 = vunpack.c.l.b16 %v1284
      %v1532 = vunpack.c.l.b16 %v1285
      %v1533 = vunpack.c.l.b16 %v1286
      %v1534 = vunpack.c.l.b16 %v1287
      %v1535 = vunpack.c.l.b16 %v1288
      %v1536 = vunpack.c.l.b16 %v1289
      %v1537 = vunpack.c.l.b16 %v1290
      %v1538 = vpack.c.b16 %v1443, %v1442
      %v1539 = vpack.c.b16 %v1445, %v1444
      %v1540 = vpack.c.b16 %v1447, %v1446
      %v1541 = vpack.c.b16 %v1449, %v1448
      %v1542 = vpack.c.b16 %v1451, %v1450
      %v1543 = vpack.c.b16 %v1453, %v1452
      %v1544 = vpack.c.b16 %v1455, %v1454
      %v1545 = vpack.c.b16 %v1457, %v1456
      %v1546 = vpack.c.b16 %v1459, %v1458
      %v1547 = vpack.c.b16 %v1461, %v1460
      %v1548 = vpack.c.b16 %v1463, %v1462
      %v1549 = vpack.c.b16 %v1465, %v1464
      %v1550 = vpack.c.b16 %v1467, %v1466
      %v1551 = vpack.c.b16 %v1469, %v1468
      %v1552 = vpack.c.b16 %v1471, %v1470
      %v1553 = vpack.c.b16 %v1473, %v1472
      %v1554 = vpack.c.b16 %v1475, %v1474
      %v1555 = vpack.c.b16 %v1477, %v1476
      %v1556 = vpack.c.b16 %v1479, %v1478
      %v1557 = vpack.c.b16 %v1481, %v1480
      %v1558 = vpack.c.b16 %v1483, %v1482
      %v1559 = vpack.c.b16 %v1485, %v1484
      %v1560 = vpack.c.b16 %v1487, %v1486
      %v1561 = vpack.c.b16 %v1489, %v1488
      %v1562 = vpack.c.b16 %v1491, %v1490
      %v1563 = vpack.c.b16 %v1493, %v1492
      %v1564 = vpack.c.b16 %v1495, %v1494
      %v1565 = vpack.c.b16 %v1497, %v1496
      %v1566 = vpack.c.b16 %v1499, %v1498
      %v1567 = vpack.c.b16 %v1501, %v1500
      %v1568 = vpack.c.b16 %v1503, %v1502
      %v1569 = vpack.c.b16 %v1505, %v1504
      %v1570 = vpack.c.b16 %v1507, %v1506
      %v1571 = vpack.c.b16 %v1509, %v1508
      %v1572 = vpack.c.b16 %v1511, %v1510
      %v1573 = vpack.c.b16 %v1513, %v1512
      %v1574 = vpack.c.b16 %v1515, %v1514
      %v1575 = vpack.c.b16 %v1517, %v1516
      %v1576 = vpack.c.b16 %v1519, %v1518
      %v1577 = vpack.c.b16 %v1521, %v1520
      %v1578 = vpack.c.b16 %v1523, %v1522
      %v1579 = vpack.c.b16 %v1525, %v1524
      %v1580 = vpack.c.b16 %v1527, %v1526
      %v1581 = vpack.c.b16 %v1529, %v1528
      %v1582 = vpack.c.b16 %v1531, %v1530
      %v1583 = vpack.c.b16 %v1533, %v1532
      %v1584 = vpack.c.b16 %v1535, %v1534
      %v1585 = vpack.c.b16 %v1537, %v1536
      %1634 = vmatprep.subr.bf16.mxu0 0
      %1635 = vmatpush1.bf16.msra.mxu0 %v1538
      %1636 = vmatprep.subr.bf16.mxu0 0
      %1637 = vmatpush1.bf16.msra.mxu0 %v1539
      %1638 = vmatprep.subr.bf16.mxu0 0
      %1639 = vmatpush1.bf16.msra.mxu0 %v1540
      %1640 = vmatprep.subr.bf16.mxu0 0
      %1641 = vmatpush1.bf16.msra.mxu0 %v1541
      %1642 = vmatprep.subr.bf16.mxu0 0
      %1643 = vmatpush1.bf16.msra.mxu0 %v1542
      %1644 = vmatprep.subr.bf16.mxu0 0
      %1645 = vmatpush1.bf16.msra.mxu0 %v1543
      %1646 = vmatprep.subr.bf16.mxu0 0
      %1647 = vmatpush1.bf16.msra.mxu0 %v1544
      %1648 = vmatprep.subr.bf16.mxu0 0
      %1649 = vmatpush1.bf16.msra.mxu0 %v1545
      %1650 = vmatprep.subr.bf16.mxu0 0
      %1651 = vmatpush1.bf16.msra.mxu0 %v1546
      %1652 = vmatprep.subr.bf16.mxu0 0
      %1653 = vmatpush1.bf16.msra.mxu0 %v1547
      %1654 = vmatprep.subr.bf16.mxu0 0
      %1655 = vmatpush1.bf16.msra.mxu0 %v1548
      %1656 = vmatprep.subr.bf16.mxu0 0
      %1657 = vmatpush1.bf16.msra.mxu0 %v1549
      %1658 = vmatprep.subr.bf16.mxu0 0
      %1659 = vmatpush1.bf16.msra.mxu0 %v1550
      %1660 = vmatprep.subr.bf16.mxu0 0
      %1661 = vmatpush1.bf16.msra.mxu0 %v1551
      %1662 = vmatprep.subr.bf16.mxu0 0
      %1663 = vmatpush1.bf16.msra.mxu0 %v1552
      %1664 = vmatprep.subr.bf16.mxu0 0
      %1665 = vmatpush1.bf16.msra.mxu0 %v1553
      %1666 = vmatprep.mubr.bf16.mxu0 %v1299
      %1667 = vmatmul.mubr.bf16.gmra.mrb[0].mxu0 %v1298
      %v1668 = vpop.f32.mrb[0].mxu0
      %v1669 = vadd.f32 %v1296, %v1668
      %v1670 = vpop.f32.mrb[0].mxu0
      %v1671 = vpop.f32.mrb[0].mxu0
      %v1672 = vadd.f32 %v1296, %v1671
      %v1673 = vpop.f32.mrb[0].mxu0
      %1674 = vmatprep.mubr.bf16.mxu0 %v1305
      %1675 = vmatmul.mubr.bf16.gmra.mrb[0].mxu0 %v1304
      %v1676 = vpop.f32.mrb[0].mxu0
      %v1677 = vadd.f32 %v1296, %v1676
      %v1678 = vpop.f32.mrb[0].mxu0
      %v1679 = vpop.f32.mrb[0].mxu0
      %v1680 = vadd.f32 %v1296, %v1679
      %v1681 = vpop.f32.mrb[0].mxu0
      %1682 = vmatprep.mubr.bf16.mxu0 %v1311
      %1683 = vmatmul.mubr.bf16.gmra.mrb[0].mxu0 %v1310
      %v1684 = vpop.f32.mrb[0].mxu0
      %v1685 = vadd.f32 %v1296, %v1684
      %v1686 = vpop.f32.mrb[0].mxu0
      %v1687 = vpop.f32.mrb[0].mxu0
      %v1688 = vadd.f32 %v1296, %v1687
      %v1689 = vpop.f32.mrb[0].mxu0
      %1690 = vmatprep.mubr.bf16.mxu0 %v1317
      %1691 = vmatmul.mubr.bf16.gmra.mrb[0].mxu0 %v1316
      %v1692 = vpop.f32.mrb[0].mxu0
      %v1693 = vadd.f32 %v1296, %v1692
      %v1694 = vpop.f32.mrb[0].mxu0
      %v1695 = vpop.f32.mrb[0].mxu0
      %v1696 = vadd.f32 %v1296, %v1695
      %v1697 = vpop.f32.mrb[0].mxu0
      %1698 = vdwg.mxu0
      %1699 = vmatprep.subr.bf16.mxu0 0
      %1700 = vmatpush1.bf16.msra.mxu0 %v1554
      %1701 = vmatprep.subr.bf16.mxu0 0
      %1702 = vmatpush1.bf16.msra.mxu0 %v1555
      %1703 = vmatprep.subr.bf16.mxu0 0
      %1704 = vmatpush1.bf16.msra.mxu0 %v1556
      %1705 = vmatprep.subr.bf16.mxu0 0
      %1706 = vmatpush1.bf16.msra.mxu0 %v1557
      %1707 = vmatprep.subr.bf16.mxu0 0
      %1708 = vmatpush1.bf16.msra.mxu0 %v1558
      %1709 = vmatprep.subr.bf16.mxu0 0
      %1710 = vmatpush1.bf16.msra.mxu0 %v1559
      %1711 = vmatprep.subr.bf16.mxu0 0
      %1712 = vmatpush1.bf16.msra.mxu0 %v1560
      %1713 = vmatprep.subr.bf16.mxu0 0
      %1714 = vmatpush1.bf16.msra.mxu0 %v1561
      %1715 = vmatprep.subr.bf16.mxu0 0
      %1716 = vmatpush1.bf16.msra.mxu0 %v1562
      %1717 = vmatprep.subr.bf16.mxu0 0
      %1718 = vmatpush1.bf16.msra.mxu0 %v1563
      %1719 = vmatprep.subr.bf16.mxu0 0
      %1720 = vmatpush1.bf16.msra.mxu0 %v1564
      %1721 = vmatprep.subr.bf16.mxu0 0
      %1722 = vmatpush1.bf16.msra.mxu0 %v1565
      %1723 = vmatprep.subr.bf16.mxu0 0
      %1724 = vmatpush1.bf16.msra.mxu0 %v1566
      %1725 = vmatprep.subr.bf16.mxu0 0
      %1726 = vmatpush1.bf16.msra.mxu0 %v1567
      %1727 = vmatprep.subr.bf16.mxu0 0
      %1728 = vmatpush1.bf16.msra.mxu0 %v1568
      %1729 = vmatprep.subr.bf16.mxu0 0
      %1730 = vmatpush1.bf16.msra.mxu0 %v1569
      %1731 = vmatprep.mubr.bf16.mxu0 %v1301
      %1732 = vmatmul.mubr.bf16.gmra.mrb[0].mxu0 %v1300
      %v1733 = vpop.f32.mrb[0].mxu0
      %v1734 = vadd.f32 %v1669, %v1733
      %v1735 = vpop.f32.mrb[0].mxu0
      %v1736 = vpop.f32.mrb[0].mxu0
      %v1737 = vadd.f32 %v1672, %v1736
      %v1738 = vpop.f32.mrb[0].mxu0
      %1739 = vmatprep.mubr.bf16.mxu0 %v1307
      %1740 = vmatmul.mubr.bf16.gmra.mrb[0].mxu0 %v1306
      %v1741 = vpop.f32.mrb[0].mxu0
      %v1742 = vadd.f32 %v1677, %v1741
      %v1743 = vpop.f32.mrb[0].mxu0
      %v1744 = vpop.f32.mrb[0].mxu0
      %v1745 = vadd.f32 %v1680, %v1744
      %v1746 = vpop.f32.mrb[0].mxu0
      %1747 = vmatprep.mubr.bf16.mxu0 %v1313
      %1748 = vmatmul.mubr.bf16.gmra.mrb[0].mxu0 %v1312
      %v1749 = vpop.f32.mrb[0].mxu0
      %v1750 = vadd.f32 %v1685, %v1749
      %v1751 = vpop.f32.mrb[0].mxu0
      %v1752 = vpop.f32.mrb[0].mxu0
      %v1753 = vadd.f32 %v1688, %v1752
      %v1754 = vpop.f32.mrb[0].mxu0
      %1755 = vmatprep.mubr.bf16.mxu0 %v1319
      %1756 = vmatmul.mubr.bf16.gmra.mrb[0].mxu0 %v1318
      %v1757 = vpop.f32.mrb[0].mxu0
      %v1758 = vadd.f32 %v1693, %v1757
      %v1759 = vpop.f32.mrb[0].mxu0
      %v1760 = vpop.f32.mrb[0].mxu0
      %v1761 = vadd.f32 %v1696, %v1760
      %v1762 = vpop.f32.mrb[0].mxu0
      %1763 = vdwg.mxu0
      %1764 = vmatprep.subr.bf16.mxu0 0
      %1765 = vmatpush1.bf16.msra.mxu0 %v1570
      %1766 = vmatprep.subr.bf16.mxu0 0
      %1767 = vmatpush1.bf16.msra.mxu0 %v1571
      %1768 = vmatprep.subr.bf16.mxu0 0
      %1769 = vmatpush1.bf16.msra.mxu0 %v1572
      %1770 = vmatprep.subr.bf16.mxu0 0
      %1771 = vmatpush1.bf16.msra.mxu0 %v1573
      %1772 = vmatprep.subr.bf16.mxu0 0
      %1773 = vmatpush1.bf16.msra.mxu0 %v1574
      %1774 = vmatprep.subr.bf16.mxu0 0
      %1775 = vmatpush1.bf16.msra.mxu0 %v1575
      %1776 = vmatprep.subr.bf16.mxu0 0
      %1777 = vmatpush1.bf16.msra.mxu0 %v1576
      %1778 = vmatprep.subr.bf16.mxu0 0
      %1779 = vmatpush1.bf16.msra.mxu0 %v1577
      %1780 = vmatprep.subr.bf16.mxu0 0
      %1781 = vmatpush1.bf16.msra.mxu0 %v1578
      %1782 = vmatprep.subr.bf16.mxu0 0
      %1783 = vmatpush1.bf16.msra.mxu0 %v1579
      %1784 = vmatprep.subr.bf16.mxu0 0
      %1785 = vmatpush1.bf16.msra.mxu0 %v1580
      %1786 = vmatprep.subr.bf16.mxu0 0
      %1787 = vmatpush1.bf16.msra.mxu0 %v1581
      %1788 = vmatprep.subr.bf16.mxu0 0
      %1789 = vmatpush1.bf16.msra.mxu0 %v1582
      %1790 = vmatprep.subr.bf16.mxu0 0
      %1791 = vmatpush1.bf16.msra.mxu0 %v1583
      %1792 = vmatprep.subr.bf16.mxu0 0
      %1793 = vmatpush1.bf16.msra.mxu0 %v1584
      %1794 = vmatprep.subr.bf16.mxu0 0
      %1795 = vmatpush1.bf16.msra.mxu0 %v1585
      %1796 = vmatprep.mubr.bf16.mxu0 %v1303
      %1797 = vmatmul.mubr.bf16.gmra.mrb[0].mxu0 %v1302
      %v1798 = vpop.f32.mrb[0].mxu0
      %v1799 = vadd.f32 %v1734, %v1798
      %v1800 = vpop.f32.mrb[0].mxu0
      %v1801 = vpop.f32.mrb[0].mxu0
      %v1802 = vadd.f32 %v1737, %v1801
      %v1803 = vpop.f32.mrb[0].mxu0
      %1804 = vmatprep.mubr.bf16.mxu0 %v1309
      %1805 = vmatmul.mubr.bf16.gmra.mrb[0].mxu0 %v1308
      %v1806 = vpop.f32.mrb[0].mxu0
      %v1807 = vadd.f32 %v1742, %v1806
      %v1808 = vpop.f32.mrb[0].mxu0
      %v1809 = vpop.f32.mrb[0].mxu0
      %v1810 = vadd.f32 %v1745, %v1809
      %v1811 = vpop.f32.mrb[0].mxu0
      %1812 = vmatprep.mubr.bf16.mxu0 %v1315
      %1813 = vmatmul.mubr.bf16.gmra.mrb[0].mxu0 %v1314
      %v1814 = vpop.f32.mrb[0].mxu0
      %v1815 = vadd.f32 %v1750, %v1814
      %v1816 = vpop.f32.mrb[0].mxu0
      %v1817 = vpop.f32.mrb[0].mxu0
      %v1818 = vadd.f32 %v1753, %v1817
      %v1819 = vpop.f32.mrb[0].mxu0
      %1820 = vmatprep.mubr.bf16.mxu0 %v1321
      %1821 = vmatmul.mubr.bf16.gmra.mrb[0].mxu0 %v1320
      %v1822 = vpop.f32.mrb[0].mxu0
      %v1823 = vadd.f32 %v1758, %v1822
      %v1824 = vpop.f32.mrb[0].mxu0
      %v1825 = vpop.f32.mrb[0].mxu0
      %v1826 = vadd.f32 %v1761, %v1825
      %v1827 = vpop.f32.mrb[0].mxu0
      %1828 = vdwg.mxu0
      %v1829 = vmax.f32 %v1799, 0.0
      %v1830 = vmax.f32 %v1802, 0.0
      %v1831 = vmax.f32 %v1807, 0.0
      %v1832 = vmax.f32 %v1810, 0.0
      %v1833 = vmax.f32 %v1815, 0.0
      %v1834 = vmax.f32 %v1818, 0.0
      %v1835 = vmax.f32 %v1823, 0.0
      %v1836 = vmax.f32 %v1826, 0.0
      %v1845 = vrot.slane %v1829, 1
      %v1846 = vrot.slane %v1830, 1
      %v1847 = vrot.slane %v1831, 1
      %v1848 = vrot.slane %v1832, 1
      %v1849 = vrot.slane %v1833, 1
      %v1850 = vrot.slane %v1834, 1
      %v1851 = vrot.slane %v1835, 1
      %v1852 = vrot.slane %v1836, 1
      %vm1861 = vcmask 1046528
      %v1862 = vsel %vm1861, %v1845, 0.0
      %v1863 = vsel %vm1861, %v1846, 0.0
      %v1864 = vsel %vm1861, %v1847, 0.0
      %v1865 = vsel %vm1861, %v1848, 0.0
      %v1866 = vsel %vm1861, %v1849, 0.0
      %v1867 = vsel %vm1861, %v1850, 0.0
      %v1868 = vsel %vm1861, %v1851, 0.0
      %v1869 = vsel %vm1861, %v1852, 0.0
      %v1870 = vrot.slane %v1829, 2
      %v1871 = vrot.slane %v1830, 2
      %v1872 = vrot.slane %v1831, 2
      %v1873 = vrot.slane %v1832, 2
      %v1874 = vrot.slane %v1833, 2
      %v1875 = vrot.slane %v1834, 2
      %v1876 = vrot.slane %v1835, 2
      %v1877 = vrot.slane %v1836, 2
      %v1886 = vsel %vm1002, %v1870, 0.0
      %v1887 = vsel %vm1002, %v1871, 0.0
      %v1888 = vsel %vm1002, %v1872, 0.0
      %v1889 = vsel %vm1002, %v1873, 0.0
      %v1890 = vsel %vm1002, %v1874, 0.0
      %v1891 = vsel %vm1002, %v1875, 0.0
      %v1892 = vsel %vm1002, %v1876, 0.0
      %v1893 = vsel %vm1002, %v1877, 0.0
      %v1894 = vmax.f32 %v1829, %v1862
      %v1895 = vmax.f32 %v1830, %v1863
      %v1896 = vmax.f32 %v1831, %v1864
      %v1897 = vmax.f32 %v1832, %v1865
      %v1898 = vmax.f32 %v1833, %v1866
      %v1899 = vmax.f32 %v1834, %v1867
      %v1900 = vmax.f32 %v1835, %v1868
      %v1901 = vmax.f32 %v1836, %v1869
      %v1902 = vmax.f32 %v1894, %v1886
      %v1903 = vmax.f32 %v1895, %v1887
      %v1904 = vmax.f32 %v1896, %v1888
      %v1905 = vmax.f32 %v1897, %v1889
      %v1906 = vmax.f32 %v1898, %v1890
      %v1907 = vmax.f32 %v1899, %v1891
      %v1908 = vmax.f32 %v1900, %v1892
      %v1909 = vmax.f32 %v1901, %v1893
      %v1910 = vlaneseq
      %v1911 = vshrl.u32 %v1910, 7
      %vm1912 = vcmp.lt.s32.totalorder %v1911, 0
      %v1913 = vsub.s32 0, %v1911
      %v1914 = vsel %vm1912, %v1913, %v1911
      %v1915 = vmul.u32.u64.compose %v1914, 2863311531
      %v1916 = vextract.low.u32 %v1915
      %v1917 = vextract.high.u32 %v1915
      %v1918 = vshrl.u32 %v1917, 1
      %v1919 = vmul.u32 %v1918, 3
      %v1920 = vsub.s32 %v1914, %v1919
      %v1921 = vsub.s32 0, %v1920
      %v1922 = vsel %vm1912, %v1921, %v1920
      %vm1923 = vcmp.ne.s32.totalorder %v1922, 0
      %vm1924 = vcmp.lt.s32.totalorder %v1922, 0
      %vm1925 = vmand %vm1924, %vm1923
      %v1926 = vadd.s32 %v1922, 3
      %v1927 = vsel %vm1925, %v1926, %v1922
      %vm1928 = vcmp.eq.s32.totalorder %v1927, 0
      %vm1929 = vcmp.lt.s32.totalorder %v1911, 6
      %vm1930 = vmand %vm1928, %vm1929
      %v1931 = vsel %vm1930, 1, 0
      %v1932 = vcvt.s32.f32 %v1931
      %v1933 = vmul.f32 %v1902, %v1932
      %v1934 = vmul.f32 %v1903, %v1932
      %v1935 = vmul.f32 %v1904, %v1932
      %v1936 = vmul.f32 %v1905, %v1932
      %v1937 = vmul.f32 %v1906, %v1932
      %v1938 = vmul.f32 %v1907, %v1932
      %v1939 = vmul.f32 %v1908, %v1932
      %v1940 = vmul.f32 %v1909, %v1932
      %v1941 = vrot.slane %v1933, 4
      %v1942 = vadd.f32 %v1933, %v1941
      %v1943 = vrot.slane %v1942, 2
      %v1944 = vadd.f32 %v1942, %v1943
      %v1945 = vrot.slane %v1944, 1
      %v1946 = vadd.f32 %v1944, %v1945
      %v1947 = vrot.slane %v1934, 4
      %v1948 = vadd.f32 %v1934, %v1947
      %v1949 = vrot.slane %v1948, 2
      %v1950 = vadd.f32 %v1948, %v1949
      %v1951 = vrot.slane %v1950, 1
      %v1952 = vadd.f32 %v1950, %v1951
      %v1953 = vrot.slane %v1935, 4
      %v1954 = vadd.f32 %v1935, %v1953
      %v1955 = vrot.slane %v1954, 2
      %v1956 = vadd.f32 %v1954, %v1955
      %v1957 = vrot.slane %v1956, 1
      %v1958 = vadd.f32 %v1956, %v1957
      %v1959 = vrot.slane %v1936, 4
      %v1960 = vadd.f32 %v1936, %v1959
      %v1961 = vrot.slane %v1960, 2
      %v1962 = vadd.f32 %v1960, %v1961
      %v1963 = vrot.slane %v1962, 1
      %v1964 = vadd.f32 %v1962, %v1963
      %v1965 = vrot.slane %v1937, 4
      %v1966 = vadd.f32 %v1937, %v1965
      %v1967 = vrot.slane %v1966, 2
      %v1968 = vadd.f32 %v1966, %v1967
      %v1969 = vrot.slane %v1968, 1
      %v1970 = vadd.f32 %v1968, %v1969
      %v1971 = vrot.slane %v1938, 4
      %v1972 = vadd.f32 %v1938, %v1971
      %v1973 = vrot.slane %v1972, 2
      %v1974 = vadd.f32 %v1972, %v1973
      %v1975 = vrot.slane %v1974, 1
      %v1976 = vadd.f32 %v1974, %v1975
      %v1977 = vrot.slane %v1939, 4
      %v1978 = vadd.f32 %v1939, %v1977
      %v1979 = vrot.slane %v1978, 2
      %v1980 = vadd.f32 %v1978, %v1979
      %v1981 = vrot.slane %v1980, 1
      %v1982 = vadd.f32 %v1980, %v1981
      %v1983 = vrot.slane %v1940, 4
      %v1984 = vadd.f32 %v1940, %v1983
      %v1985 = vrot.slane %v1984, 2
      %v1986 = vadd.f32 %v1984, %v1985
      %v1987 = vrot.slane %v1986, 1
      %v1988 = vadd.f32 %v1986, %v1987
      %v1989 = vmul.f32 %v1946, 0.5
      %v1990 = vmul.f32 %v1952, 0.5
      %v1991 = vmul.f32 %v1958, 0.5
      %v1992 = vmul.f32 %v1964, 0.5
      %v1993 = vmul.f32 %v1970, 0.5
      %v1994 = vmul.f32 %v1976, 0.5
      %v1995 = vmul.f32 %v1982, 0.5
      %v1996 = vmul.f32 %v1988, 0.5
      %v1997 = vpack.c.bf16 %v1989, %v1989
      %v1998 = vpack.c.bf16 %v1990, %v1990
      %v1999 = vpack.c.bf16 %v1991, %v1991
      %v2000 = vpack.c.bf16 %v1992, %v1992
      %v2001 = vpack.c.bf16 %v1993, %v1993
      %v2002 = vpack.c.bf16 %v1994, %v1994
      %v2003 = vpack.c.bf16 %v1995, %v1995
      %v2004 = vpack.c.bf16 %v1996, %v1996
      %v2005 = vld [vmem:[%s5] sm:$0xf]
      %v2006 = vld [vmem:[%s5 + $0x4] sm:$0xf]
      %v2007 = vld [vmem:[%s5 + $0x8] sm:$0xf]
      %v2008 = vld [vmem:[%s5 + $0xc] sm:$0xf]
      %v2009 = vld [vmem:[%s5 + $0x10] sm:$0xf]
      %v2010 = vld [vmem:[%s5 + $0x14] sm:$0xf]
      %v2011 = vld [vmem:[%s5 + $0x18] sm:$0xf]
      %v2012 = vld [vmem:[%s5 + $0x1c] sm:$0xf]
      %v2013 = vld [vmem:[%s5 + $0x20] sm:$0xf]
      %v2014 = vld [vmem:[%s5 + $0x24] sm:$0xf]
      %v2015 = vld [vmem:[%s5 + $0x28] sm:$0xf]
      %v2016 = vld [vmem:[%s5 + $0x2c] sm:$0xf]
      %v2017 = vld [vmem:[%s5 + $0x30] sm:$0xf]
      %v2018 = vld [vmem:[%s5 + $0x34] sm:$0xf]
      %v2019 = vld [vmem:[%s5 + $0x38] sm:$0xf]
      %v2020 = vld [vmem:[%s5 + $0x3c] sm:$0xf]
      %v2021 = vld [vmem:[%s6] sm:$0x1]
      %v2023 = vlaneseq
      %v2024 = vshrl.u32 %v2023, 7
      %v2025 = vsub.s32 0, %v2024
      %v2026 = vrot.slane %v2021, %v2025
      %v2036 = vunpack.c.l.b16 %v1997
      %v2037 = vunpack.c.l.b16 %v1998
      %v2038 = vunpack.c.l.b16 %v1999
      %v2039 = vunpack.c.l.b16 %v2000
      %v2040 = vunpack.c.l.b16 %v2001
      %v2041 = vunpack.c.l.b16 %v2002
      %v2042 = vunpack.c.l.b16 %v2003
      %v2043 = vunpack.c.l.b16 %v2004
      %vm2044 = vcmask 1041409
      %v2045 = vsel %vm2044, %v2037, %v2036
      %vm2046 = vcmask 1042434
      %v2047 = vsel %vm2046, %v2038, %v2045
      %vm2048 = vcmask 1043459
      %v2049 = vsel %vm2048, %v2039, %v2047
      %vm2050 = vcmask 1044484
      %v2051 = vsel %vm2050, %v2040, %v2049
      %vm2052 = vcmask 1045509
      %v2053 = vsel %vm2052, %v2041, %v2051
      %vm2054 = vcmask 1046534
      %v2055 = vsel %vm2054, %v2042, %v2053
      %vm2056 = vcmask 1047559
      %v2057 = vsel %vm2056, %v2043, %v2055
      %v2058 = vpack.c.b16 %v2057, %v2057
      %v2076 = vunpack.c.l.b16 %v2005
      %v2077 = vunpack.c.l.b16 %v2006
      %v2078 = vunpack.c.l.b16 %v2007
      %v2079 = vunpack.c.l.b16 %v2008
      %v2080 = vunpack.c.l.b16 %v2009
      %v2081 = vunpack.c.l.b16 %v2010
      %v2082 = vunpack.c.l.b16 %v2011
      %v2083 = vunpack.c.l.b16 %v2012
      %v2084 = vunpack.c.l.b16 %v2013
      %v2085 = vunpack.c.l.b16 %v2014
      %v2086 = vunpack.c.l.b16 %v2015
      %v2087 = vunpack.c.l.b16 %v2016
      %v2088 = vunpack.c.l.b16 %v2017
      %v2089 = vunpack.c.l.b16 %v2018
      %v2090 = vunpack.c.l.b16 %v2019
      %v2091 = vunpack.c.l.b16 %v2020
      %v2092 = vpack.c.b16 %v2077, %v2076
      %v2093 = vpack.c.b16 %v2079, %v2078
      %v2094 = vpack.c.b16 %v2081, %v2080
      %v2095 = vpack.c.b16 %v2083, %v2082
      %v2096 = vpack.c.b16 %v2085, %v2084
      %v2097 = vpack.c.b16 %v2087, %v2086
      %v2098 = vpack.c.b16 %v2089, %v2088
      %v2099 = vpack.c.b16 %v2091, %v2090
      %2108 = vmatprep.subr.bf16.mxu0 0
      %2109 = vmatpush1.bf16.msra.mxu0 %v2092
      %2110 = vmatprep.subr.bf16.mxu0 0
      %2111 = vmatpush1.bf16.msra.mxu0 %v2093
      %2112 = vmatprep.subr.bf16.mxu0 0
      %2113 = vmatpush1.bf16.msra.mxu0 %v2094
      %2114 = vmatprep.subr.bf16.mxu0 0
      %2115 = vmatpush1.bf16.msra.mxu0 %v2095
      %2116 = vmatprep.subr.bf16.mxu0 0
      %2117 = vmatpush1.bf16.msra.mxu0 %v2096
      %2118 = vmatprep.subr.bf16.mxu0 0
      %2119 = vmatpush1.bf16.msra.mxu0 %v2097
      %2120 = vmatprep.subr.bf16.mxu0 0
      %2121 = vmatpush1.bf16.msra.mxu0 %v2098
      %2122 = vmatprep.subr.bf16.mxu0 0
      %2123 = vmatpush1.bf16.msra.mxu0 %v2099
      %2124 = vmatprep.subr.bf16.mxu0 0
      %2125 = vmatpush1.bf16.msra.mxu0 0
      %2126 = vmatprep.subr.bf16.mxu0 0
      %2127 = vmatpush1.bf16.msra.mxu0 0
      %2128 = vmatprep.subr.bf16.mxu0 0
      %2129 = vmatpush1.bf16.msra.mxu0 0
      %2130 = vmatprep.subr.bf16.mxu0 0
      %2131 = vmatpush1.bf16.msra.mxu0 0
      %2132 = vmatprep.subr.bf16.mxu0 0
      %2133 = vmatpush1.bf16.msra.mxu0 0
      %2134 = vmatprep.subr.bf16.mxu0 0
      %2135 = vmatpush1.bf16.msra.mxu0 0
      %2136 = vmatprep.subr.bf16.mxu0 0
      %2137 = vmatpush1.bf16.msra.mxu0 0
      %2138 = vmatprep.subr.bf16.mxu0 0
      %2139 = vmatpush1.bf16.msra.mxu0 0
      %2140 = vmatprep.mubr.bf16.mxu0 0
      %2141 = vmatmul.mubr.bf16.gmra.mrb[0].mxu0 %v2058
      %v2142 = vpop.f32.mrb[0].mxu0
      %v2143 = vadd.f32 %v2026, %v2142
      %v2144 = vpop.f32.mrb[0].mxu0
      %v2145 = vpop.f32.mrb[0].mxu0
      %v2146 = vpop.f32.mrb[0].mxu0
      %2147 = vdwg.mxu0
      %v2148 = vmax.f32 %v2143, 0.0
      %v2149 = vpack.c.bf16 %v2148, %v2148
      %v2150 = vld [vmem:[%s7] sm:$0xf]
      %v2151 = vld [vmem:[%s7 + $0x4] sm:$0xf]
      %v2152 = vld [vmem:[%s7 + $0x8] sm:$0xf]
      %v2153 = vld [vmem:[%s7 + $0xc] sm:$0xf]
      %v2154 = vld [vmem:[%s7 + $0x10] sm:$0xf]
      %v2155 = vld [vmem:[%s7 + $0x14] sm:$0xf]
      %v2156 = vld [vmem:[%s7 + $0x18] sm:$0xf]
      %v2157 = vld [vmem:[%s7 + $0x1c] sm:$0xf]
      %v2158 = vld [vmem:[#allocation2] sm:$0x1]
      %v2160 = vlaneseq
      %v2161 = vshrl.u32 %v2160, 7
      %v2162 = vsub.s32 0, %v2161
      %v2163 = vrot.slane %v2158, %v2162
      %v2173 = vunpack.c.l.b16 %v2150
      %v2174 = vunpack.c.l.b16 %v2151
      %v2175 = vunpack.c.l.b16 %v2152
      %v2176 = vunpack.c.l.b16 %v2153
      %v2177 = vunpack.c.l.b16 %v2154
      %v2178 = vunpack.c.l.b16 %v2155
      %v2179 = vunpack.c.l.b16 %v2156
      %v2180 = vunpack.c.l.b16 %v2157
      %v2181 = vpack.c.b16 %v2174, %v2173
      %v2182 = vpack.c.b16 %v2176, %v2175
      %v2183 = vpack.c.b16 %v2178, %v2177
      %v2184 = vpack.c.b16 %v2180, %v2179
      %vm2189 = vcmask 523264
      %v2191 = vsel %vm2189, %v2149, 0
      %2193 = vmatprep.subr.bf16.mxu0 0
      %2194 = vmatpush1.bf16.msra.mxu0 %v2181
      %2195 = vmatprep.subr.bf16.mxu0 0
      %2196 = vmatpush1.bf16.msra.mxu0 %v2182
      %2197 = vmatprep.subr.bf16.mxu0 0
      %2198 = vmatpush1.bf16.msra.mxu0 %v2183
      %2199 = vmatprep.subr.bf16.mxu0 0
      %2200 = vmatpush1.bf16.msra.mxu0 %v2184
      %2201 = vmatprep.subr.bf16.mxu0 0
      %2202 = vmatpush1.bf16.msra.mxu0 0
      %2203 = vmatprep.subr.bf16.mxu0 0
      %2204 = vmatpush1.bf16.msra.mxu0 0
      %2205 = vmatprep.subr.bf16.mxu0 0
      %2206 = vmatpush1.bf16.msra.mxu0 0
      %2207 = vmatprep.subr.bf16.mxu0 0
      %2208 = vmatpush1.bf16.msra.mxu0 0
      %2209 = vmatprep.subr.bf16.mxu0 0
      %2210 = vmatpush1.bf16.msra.mxu0 0
      %2211 = vmatprep.subr.bf16.mxu0 0
      %2212 = vmatpush1.bf16.msra.mxu0 0
      %2213 = vmatprep.subr.bf16.mxu0 0
      %2214 = vmatpush1.bf16.msra.mxu0 0
      %2215 = vmatprep.subr.bf16.mxu0 0
      %2216 = vmatpush1.bf16.msra.mxu0 0
      %2217 = vmatprep.subr.bf16.mxu0 0
      %2218 = vmatpush1.bf16.msra.mxu0 0
      %2219 = vmatprep.subr.bf16.mxu0 0
      %2220 = vmatpush1.bf16.msra.mxu0 0
      %2221 = vmatprep.subr.bf16.mxu0 0
      %2222 = vmatpush1.bf16.msra.mxu0 0
      %2223 = vmatprep.subr.bf16.mxu0 0
      %2224 = vmatpush1.bf16.msra.mxu0 0
      %2225 = vmatprep.mubr.bf16.mxu0 0
      %2226 = vmatmul.mubr.bf16.gmra.mrb[0].mxu0 %v2191
      %v2227 = vpop.f32.mrb[0].mxu0
      %v2228 = vadd.f32 %v2163, %v2227
      %v2229 = vpop.f32.mrb[0].mxu0
      %v2230 = vpop.f32.mrb[0].mxu0
      %v2231 = vpop.f32.mrb[0].mxu0
      %2232 = vdwg.mxu0
      %v2233 = vxor.u32 %v2228, 2147483648
      %v2234 = vmul.f32 %v2233, 1.442695
      %v2235 = vpow.pop %v2234
      %v2236 = vadd.f32 %v2235, 1.0
      %v2237 = vrcp.pop %v2236
      %v2238 = vmul.f32 1.0, %v2237
      %vm2239 = vcmask 7168
      %2240 = vst.msk [vmem:[%s337] sm:$0xff] %vm2239, %v2238
      %p2241 = scmp.lt.s32.totalorder %s22, 1
      %s2242 = scalar_select %p2241, %s22, 1
      %s2243 = smul.addr %s2242, 8
      %s2244 = scalar_lea.vmem %s9, %s2243
      // Predicated region
      $region57: #{binary_cnn_forward.1} parent=55 // pred_check
        %p2245 = pneg %p234
      $region58: #{binary_cnn_forward.1} parent=55 // pred_check_branch
        %2247 = sbr.rel (%p2245) target = $region60
      $region59: #{binary_cnn_forward.1} parent=55 // pred_region
        _
      $region60: #{binary_cnn_forward.1} parent=55 // pred_fallthru
        _
    $region56: #{binary_cnn_forward.1} parent=5 // pred_fallthru
      _
    %p2248 = scmp.le.s32.totalorder 2, %s17
    // Predicated region
    $region61: #{binary_cnn_forward.1} parent=5 // pred_check
      %p2249 = pneg %p2248
    $region62: #{binary_cnn_forward.1} parent=5 // pred_check_branch
      %2251 = sbr.rel (%p2249) target = $region64
    $region63: #{binary_cnn_forward.1} parent=5 // pred_region
      %s2252 = ssub.s32 %s17, 2
      // Predicated region
      $region65: #{binary_cnn_forward.1} parent=63 // pred_check
        %p2253 = pneg %p240
      $region66: #{binary_cnn_forward.1} parent=63 // pred_check_branch
        %2255 = sbr.rel (%p2253) target = $region68
      $region67: #{binary_cnn_forward.1} parent=63 // pred_region
        %p2256 = scmp.lt.s32.totalorder %s23, 1
        %s2257 = scalar_select %p2256, %s23, 1
        %s2258 = smul.addr %s2257, 8
        %s2259 = scalar_lea.vmem %s9, %s2258
      $region68: #{binary_cnn_forward.1} parent=63 // pred_fallthru
        _
    $region64: #{binary_cnn_forward.1} parent=5 // pred_fallthru
      _
  $region6: #{binary_cnn_forward.1} parent=0 // loop_footer
    %s21 = sadd.s32 1, %s17
  $region7: #{binary_cnn_forward.1} parent=0 // loop_footer_branch
    %16 = sbr.rel target = $region3
  $region8: #{binary_cnn_forward.1} parent=0 // loop_exit
    _

</llo_original>
